<compile_context>
chip_gen: v6e
topology: v6e:2x2x1
jax: 0.10.0
libtpu: 0.0.40
codegen_flags: <defaults>
</compile_context>

<pallas_src>
import functools

import jax
import jax.numpy as jnp
from jax.experimental import pallas as pl
from jax.experimental.pallas import tpu as pltpu


# -----------------------------------------------------------------------------
# Generation-aware VMEM budget / key-tile selection
# -----------------------------------------------------------------------------
def _vmem_budget_bytes():
    """~75% of physical VMEM, capped at 100 MiB (v5e/v6e: 128 MiB, v7x: 64 MiB)."""
    try:
        cap = int(pltpu.get_tpu_info().vmem_capacity_bytes)
    except Exception:  # info query is best-effort; fall back conservatively
        cap = 128 * 1024 * 1024
    return min(cap * 3 // 4, 100 * 1024 * 1024)


def _pick_tile_s(S, H, E, C_pad, budget, max_tile_s):
    """Largest multiple-of-128 key tile whose double-buffered K(f32) + out(f32)
    blocks (plus the resident bf16 Qg) fit inside `budget` bytes of VMEM."""
    max_tile_s = max(128, max_tile_s // 128 * 128)
    per_key_pos = 2 * (H * E * 4 + H * C_pad * 4)      # dbl-buffered K + out
    fixed = 2 * H * C_pad * E * 2 + (2 << 20)          # Qg (bf16) + headroom
    ts = (budget - fixed) // max(per_key_pos, 1)
    ts = int(ts) // 128 * 128
    # Never exceed the 128-rounded-down sequence (for S < 128 the single block
    # simply overhangs; its out-of-bounds columns are dropped by the store).
    cap = 128 * max(1, S // 128)
    return max(128, min(ts, max_tile_s, cap))


# -----------------------------------------------------------------------------
# Pallas kernel 1: per-cluster query sums  Qg[h] = A[h] @ Q[:, h, :]
# -----------------------------------------------------------------------------
def _centroid_kernel(a_ref, q_ref, qg_ref, *, H, E):
    # a_ref : (1, H, C_pad, L)  bf16 one-hot membership (masked by lengths)
    # q_ref : (1, L, H*E)       f32 queries in native (N, L, H, E) layout
    # qg_ref: (1, H, C_pad, E)  f32 un-normalised cluster sums
    for h in range(H):  # unrolled; H is small and static
        # per-head lane slice + bf16 cast in VMEM (VPU/XLU slots are idle in a
        # mem-bound kernel); one-hot A is exact in bf16, accumulation is f32.
        q_h = q_ref[0, :, h * E:(h + 1) * E].astype(jnp.bfloat16)      # (L, E)
        qg_ref[0, h] = jnp.dot(a_ref[0, h], q_h,
                               preferred_element_type=jnp.float32)     # (C_pad, E)


def _centroid_pallas(A, q_native, *, H, E, vmem_limit):
    """A: (N,H,C_pad,L) bf16, q_native: (N,L,H*E) f32 -> (N,H,C_pad,E) f32."""
    N, _, C_pad, L = A.shape
    flops = 2 * N * H * C_pad * L * E
    bytes_accessed = A.size * 2 + q_native.size * 4 + N * H * C_pad * E * 4
    # TODO(synk): add an L-tile grid axis + f32 accumulator if the (C_pad, L)
    # and (L, H*E) resident blocks ever outgrow VMEM at very long sequences.
    return pl.pallas_call(
        functools.partial(_centroid_kernel, H=H, E=E),
        out_shape=jax.ShapeDtypeStruct((N, H, C_pad, E), jnp.float32),
        grid=(N,),
        in_specs=[
            pl.BlockSpec((1, H, C_pad, L), lambda n: (n, 0, 0, 0)),
            pl.BlockSpec((1, L, H * E), lambda n: (n, 0, 0)),
        ],
        out_specs=pl.BlockSpec((1, H, C_pad, E), lambda n: (n, 0, 0, 0)),
        compiler_params=pltpu.CompilerParams(
            dimension_semantics=("parallel",),
            vmem_limit_bytes=vmem_limit),
        cost_estimate=pl.CostEstimate(flops=flops, transcendentals=0,
                                      bytes_accessed=bytes_accessed),
    )(A, q_native)


# -----------------------------------------------------------------------------
# Pallas kernel 2: QK[h] = Qg[h] @ K_tile[:, h, :]^T, streaming K in f32 native
# layout, one key tile per grid step.
# -----------------------------------------------------------------------------
def _qk_kernel(qg_ref, k_ref, qk_ref, *, H, E):
    # qg_ref: (1, H, C_pad, E)  bf16 normalised centroids (tiny, resident)
    # k_ref : (1, Ts, H*E)      f32 keys in native (N, S, H, E) layout
    # qk_ref: (1, H, C_pad, Ts) f32 output tile (lane-dense)
    for h in range(H):  # unrolled; per-head lane slice of the K tile
        k_h = k_ref[0, :, h * E:(h + 1) * E].astype(jnp.bfloat16)      # (Ts, E)
        qk_ref[0, h] = jnp.einsum('ce,se->cs', qg_ref[0, h], k_h,
                                  preferred_element_type=jnp.float32)  # (C_pad, Ts)


def _qk_pallas(qg, k_native, *, H, E, vmem_limit, max_tile_s=2048):
    """qg: (N,H,C_pad,E) bf16, k_native: (N,S,H*E) f32 -> (N,H,C_pad,S) f32."""
    N, _, C_pad, _ = qg.shape
    S = k_native.shape[1]
    ts = _pick_tile_s(S, H, E, C_pad, vmem_limit, max_tile_s)
    n_s = pl.cdiv(S, ts)

    flops = 2 * N * H * C_pad * E * S
    bytes_accessed = k_native.size * 4 + qg.size * 2 + N * H * C_pad * S * 4

    return pl.pallas_call(
        functools.partial(_qk_kernel, H=H, E=E),
        out_shape=jax.ShapeDtypeStruct((N, H, C_pad, S), jnp.float32),
        grid=(N, n_s),
        in_specs=[
            # Qg keeps the same block index across the S axis -> fetched once.
            pl.BlockSpec((1, H, C_pad, E), lambda n, s: (n, 0, 0, 0)),
            # K streamed once in native layout, f32; the ragged last tile is a
            # partial block: OOB reads are unspecified and the matching output
            # columns are dropped by the masked store, so no HBM pad of K and
            # no post-hoc output slice.
            # TODO(synk): pipeline_mode=pl.Buffered(3) on this spec if a trace
            # shows the K DMA still exposed after the larger tiles.
            pl.BlockSpec((1, ts, H * E), lambda n, s: (n, s, 0)),
        ],
        out_specs=pl.BlockSpec((1, H, C_pad, ts), lambda n, s: (n, 0, 0, s)),
        compiler_params=pltpu.CompilerParams(
            # No cross-tile scratch dependency anymore -> both axes parallel
            # (v7x: both TensorCores busy even when N == 1; no-op on v5e/v6e).
            dimension_semantics=("parallel", "parallel"),
            vmem_limit_bytes=vmem_limit),
        cost_estimate=pl.CostEstimate(flops=flops, transcendentals=0,
                                      bytes_accessed=bytes_accessed),
    )(qg, k_native)


# -----------------------------------------------------------------------------
# Glue: LSH hashing + Lloyd k-means in Hamming space (plain JAX, few FLOPs)
# -----------------------------------------------------------------------------
def _compute_hash_bits(q_nlhe, planes):
    """planes: (bits, E+1); bit b = (q . w_b + bias_b > 0)."""
    w = planes[:, :-1]                 # (B, E)
    b = planes[:, -1]                  # (B,)
    proj = jnp.einsum('nlhe,be->nhlb', q_nlhe, w) + b
    return (proj > 0).astype(jnp.float32)   # (N, H, L, B) in {0, 1}


def _hamming_kmeans(bits, valid, clusters, iterations):
    """Lloyd iterations on binary hash codes.

    bits : (N, H, L, B) float {0,1}, valid : (N, H, L) float {0,1}
    returns (assign (N,H,L) int32, onehot (N,H,L,C) float, counts (N,H,C))
    """
    N, H, L, B = bits.shape
    lengths = valid.sum(-1).astype(jnp.int32)                        # (N, H)

    # TODO(synk): centroid init heuristic of fast_transformers' CUDA clustering
    # is not documented; use evenly-spaced valid hashes instead.
    c_idx = (jnp.arange(clusters, dtype=jnp.int32)[None, None, :]
             * lengths[..., None]) // clusters                        # (N, H, C)
    c_idx = jnp.broadcast_to(c_idx[..., None], (N, H, clusters, B))
    cent0 = jnp.take_along_axis(bits, c_idx, axis=2)                  # (N, H, C, B)

    def _assign(cent):
        # hamming(x, c) = sum(x) + sum(c) - 2 * x . c   for binary vectors
        d = (bits.sum(-1)[..., None] + cent.sum(-1)[:, :, None, :]
             - 2.0 * jnp.einsum('nhlb,nhcb->nhlc', bits, cent))
        assign = jnp.argmin(d, axis=-1).astype(jnp.int32)             # (N, H, L)
        onehot = (jax.nn.one_hot(assign, clusters, dtype=jnp.float32)
                  * valid[..., None])                                 # (N, H, L, C)
        counts = onehot.sum(2)                                        # (N, H, C)
        return assign, onehot, counts

    def body(_, cent):
        _, onehot, counts = _assign(cent)
        bitsum = jnp.einsum('nhlc,nhlb->nhcb', onehot, bits)          # (N, H, C, B)
        new_cent = (2.0 * bitsum >= counts[..., None]).astype(jnp.float32)
        return jnp.where(counts[..., None] > 0, new_cent, cent)

    cent = jax.lax.fori_loop(0, iterations, body, cent0)
    return _assign(cent)


# -----------------------------------------------------------------------------
# Forward wrapper (mirrors SimulatedClusteredAttention.forward up to QK)
# -----------------------------------------------------------------------------
@functools.partial(jax.jit,
                   static_argnames=("clusters", "iterations", "bits",
                                    "hash_bias", "max_tile_s"))
def simulated_clustered_attention_qk(queries, keys, query_lengths, plane_key,
                                     *, clusters, iterations=10, bits=32,
                                     hash_bias=True, max_tile_s=2048):
    """queries (N,L,H,E), keys (N,S,H,E) -> QK (N,H,clusters,S) f32.

    Mirrors SimulatedClusteredAttention.forward up to the
    QK = einsum('nhce,nhse->nhcs', Q_grouped, keys) it stops at; attn_mask is
    unused by the reference up to that point and is therefore omitted.
    """
    queries = queries.astype(jnp.float32)
    keys = keys.astype(jnp.float32)
    N, L, H, E = queries.shape
    S = keys.shape[1]

    # --- LSH hashing + Lloyd clustering in Hamming space (cheap, plain JAX) --
    planes = jax.random.normal(plane_key, (bits, E + 1), dtype=jnp.float32)
    if not hash_bias:
        planes = planes.at[:, -1].set(0.0)
    hbits = _compute_hash_bits(queries, planes)                       # (N,H,L,B)

    valid = (jnp.arange(L)[None, None, :]
             < query_lengths[:, None, None]).astype(jnp.float32)      # (N,1,L)
    valid = jnp.broadcast_to(valid, (N, H, L))

    assign, _, _ = _hamming_kmeans(hbits, valid, clusters, iterations)

    # --- membership, clusters padded to a sublane-friendly multiple of 8 -----
    C_pad = pl.cdiv(clusters, 8) * 8
    onehot = (jax.nn.one_hot(assign, C_pad, dtype=jnp.float32)
              * valid[..., None])                                     # (N,H,L,Cp)
    counts = onehot.sum(2)                                            # (N,H,Cp)
    # one-hot membership is exact in bf16; the transpose fuses into its producer
    A = jnp.transpose(onehot, (0, 1, 3, 2)).astype(jnp.bfloat16)      # (N,H,Cp,L)

    budget = _vmem_budget_bytes()

    # --- cluster centroids (Pallas): Q read once, f32, native layout ---------
    q_native = queries.reshape(N, L, H * E)              # free metadata reshape
    qg = _centroid_pallas(A, q_native, H=H, E=E, vmem_limit=budget)   # (N,H,Cp,E)

    # 1/count folded into the tiny Qg array (not into the big QK output);
    # empty / padded clusters get zero rows.
    inv_counts = 1.0 / jnp.maximum(counts, 1.0)                       # (N,H,Cp)
    qg = (qg * inv_counts[..., None]).astype(jnp.bfloat16)

    # --- QK = Q_c @ K^T (Pallas): K streamed once, f32, native layout --------
    k_native = keys.reshape(N, S, H * E)                 # free metadata reshape
    qk = _qk_pallas(qg, k_native, H=H, E=E, vmem_limit=budget,
                    max_tile_s=max_tile_s)                            # (N,H,Cp,S)

    # TODO(synk): optional bf16 QK output / fp8 K on v7x would further halve
    # the dominant HBM streams; kept f32 logits to stay close to the reference.
    if C_pad != clusters:
        qk = qk[:, :, :clusters, :]
    return qk


if __name__ == "__main__":
    # small deterministic example; S is deliberately not a multiple of 128 so
    # the ragged last key tile (masked edge block, no HBM pad) is exercised.
    N, L, S, H, E = 2, 128, 224, 4, 64
    clusters, iterations, bits = 8, 10, 32

    key = jax.random.PRNGKey(0)
    kq, kk, kplanes = jax.random.split(key, 3)
    queries = jax.random.normal(kq, (N, L, H, E), dtype=jnp.float32)
    keys = jax.random.normal(kk, (N, S, H, E), dtype=jnp.float32)
    query_lengths = jnp.array([L, L - 16], dtype=jnp.int32)
    # attn_mask is unused by the module up to the point it stops (ipdb); omitted.

    qk = simulated_clustered_attention_qk(
        queries, keys, query_lengths, kplanes,
        clusters=clusters, iterations=iterations, bits=bits, hash_bias=True)
    jax.block_until_ready(qk)

    assert qk.shape == (N, H, clusters, S)
    assert bool(jnp.all(jnp.isfinite(qk)))
    print("KERNEL_OK")
</pallas_src>

<mosaic_0001>
module attributes {stable_mosaic.version = 11 : i64} {
  func.func @_centroid_kernel(%arg0: i32, %arg1: memref<1x4x8x128xbf16, #tpu.memory_space<vmem>>, %arg2: memref<1x128x256xf32, #tpu.memory_space<vmem>>, %arg3: memref<1x4x8x64xf32, #tpu.memory_space<vmem>>) attributes {dimension_semantics = [#tpu.dimension_semantics<parallel>], iteration_bounds = array<i64: 2>, scalar_prefetch = 0 : i64, scratch_operands = 0 : i64, tpu.core_type = #tpu.core_type<tc>, window_params = [{transform_indices = @transform_0, window_bounds = array<i64: 1, 4, 8, 128>}, {transform_indices = @transform_1, window_bounds = array<i64: 1, 128, 256>}, {transform_indices = @transform_2, window_bounds = array<i64: 1, 4, 8, 64>}]} {
    %c0 = arith.constant 0 : index
    %c0_0 = arith.constant 0 : index
    %c0_1 = arith.constant 0 : index
    %0 = vector.load %arg2[%c0, %c0_0, %c0_1] : memref<1x128x256xf32, #tpu.memory_space<vmem>>, vector<1x128x64xf32>
    %1 = vector.shape_cast %0 : vector<1x128x64xf32> to vector<128x64xf32>
    %2 = arith.truncf %1 : vector<128x64xf32> to vector<128x64xbf16>
    %c0_2 = arith.constant 0 : index
    %c0_3 = arith.constant 0 : index
    %c0_4 = arith.constant 0 : index
    %c0_5 = arith.constant 0 : index
    %3 = vector.load %arg1[%c0_2, %c0_3, %c0_4, %c0_5] : memref<1x4x8x128xbf16, #tpu.memory_space<vmem>>, vector<1x1x8x128xbf16>
    %4 = vector.shape_cast %3 : vector<1x1x8x128xbf16> to vector<8x128xbf16>
    %cst = arith.constant dense<0.000000e+00> : vector<8x64xf32>
    %5 = tpu.matmul %4, %2, %cst {dimension_numbers = #tpu.dot_dimension_numbers<[1], [0], [0], [1], [0, 0, 1, 1], [], []>} : vector<8x128xbf16>, vector<128x64xbf16>, vector<8x64xf32> -> vector<8x64xf32>
    %c0_6 = arith.constant 0 : index
    %c0_7 = arith.constant 0 : index
    %c0_8 = arith.constant 0 : index
    %c0_9 = arith.constant 0 : index
    %6 = vector.load %arg3[%c0_6, %c0_7, %c0_8, %c0_9] : memref<1x4x8x64xf32, #tpu.memory_space<vmem>>, vector<1x1x8x64xf32>
    %7 = vector.shape_cast %6 : vector<1x1x8x64xf32> to vector<8x64xf32>
    %8 = vector.shape_cast %5 : vector<8x64xf32> to vector<1x1x8x64xf32>
    tpu.vector_store %arg3[%c0_6, %c0_7, %c0_8, %c0_9], %8 {strides = array<i32>} : memref<1x4x8x64xf32, #tpu.memory_space<vmem>>, vector<1x1x8x64xf32>,
    %c0_10 = arith.constant 0 : index
    %c0_11 = arith.constant 0 : index
    %c64 = arith.constant 64 : index
    %9 = vector.load %arg2[%c0_10, %c0_11, %c64] : memref<1x128x256xf32, #tpu.memory_space<vmem>>, vector<1x128x64xf32>
    %10 = vector.shape_cast %9 : vector<1x128x64xf32> to vector<128x64xf32>
    %11 = arith.truncf %10 : vector<128x64xf32> to vector<128x64xbf16>
    %c0_12 = arith.constant 0 : index
    %c1 = arith.constant 1 : index
    %c0_13 = arith.constant 0 : index
    %c0_14 = arith.constant 0 : index
    %12 = vector.load %arg1[%c0_12, %c1, %c0_13, %c0_14] : memref<1x4x8x128xbf16, #tpu.memory_space<vmem>>, vector<1x1x8x128xbf16>
    %13 = vector.shape_cast %12 : vector<1x1x8x128xbf16> to vector<8x128xbf16>
    %cst_15 = arith.constant dense<0.000000e+00> : vector<8x64xf32>
    %14 = tpu.matmul %13, %11, %cst_15 {dimension_numbers = #tpu.dot_dimension_numbers<[1], [0], [0], [1], [0, 0, 1, 1], [], []>} : vector<8x128xbf16>, vector<128x64xbf16>, vector<8x64xf32> -> vector<8x64xf32>
    %c0_16 = arith.constant 0 : index
    %c1_17 = arith.constant 1 : index
    %c0_18 = arith.constant 0 : index
    %c0_19 = arith.constant 0 : index
    %15 = vector.load %arg3[%c0_16, %c1_17, %c0_18, %c0_19] : memref<1x4x8x64xf32, #tpu.memory_space<vmem>>, vector<1x1x8x64xf32>
    %16 = vector.shape_cast %15 : vector<1x1x8x64xf32> to vector<8x64xf32>
    %17 = vector.shape_cast %14 : vector<8x64xf32> to vector<1x1x8x64xf32>
    tpu.vector_store %arg3[%c0_16, %c1_17, %c0_18, %c0_19], %17 {strides = array<i32>} : memref<1x4x8x64xf32, #tpu.memory_space<vmem>>, vector<1x1x8x64xf32>,
    %c0_20 = arith.constant 0 : index
    %c0_21 = arith.constant 0 : index
    %c128 = arith.constant 128 : index
    %18 = vector.load %arg2[%c0_20, %c0_21, %c128] : memref<1x128x256xf32, #tpu.memory_space<vmem>>, vector<1x128x64xf32>
    %19 = vector.shape_cast %18 : vector<1x128x64xf32> to vector<128x64xf32>
    %20 = arith.truncf %19 : vector<128x64xf32> to vector<128x64xbf16>
    %c0_22 = arith.constant 0 : index
    %c2 = arith.constant 2 : index
    %c0_23 = arith.constant 0 : index
    %c0_24 = arith.constant 0 : index
    %21 = vector.load %arg1[%c0_22, %c2, %c0_23, %c0_24] : memref<1x4x8x128xbf16, #tpu.memory_space<vmem>>, vector<1x1x8x128xbf16>
    %22 = vector.shape_cast %21 : vector<1x1x8x128xbf16> to vector<8x128xbf16>
    %cst_25 = arith.constant dense<0.000000e+00> : vector<8x64xf32>
    %23 = tpu.matmul %22, %20, %cst_25 {dimension_numbers = #tpu.dot_dimension_numbers<[1], [0], [0], [1], [0, 0, 1, 1], [], []>} : vector<8x128xbf16>, vector<128x64xbf16>, vector<8x64xf32> -> vector<8x64xf32>
    %c0_26 = arith.constant 0 : index
    %c2_27 = arith.constant 2 : index
    %c0_28 = arith.constant 0 : index
    %c0_29 = arith.constant 0 : index
    %24 = vector.load %arg3[%c0_26, %c2_27, %c0_28, %c0_29] : memref<1x4x8x64xf32, #tpu.memory_space<vmem>>, vector<1x1x8x64xf32>
    %25 = vector.shape_cast %24 : vector<1x1x8x64xf32> to vector<8x64xf32>
    %26 = vector.shape_cast %23 : vector<8x64xf32> to vector<1x1x8x64xf32>
    tpu.vector_store %arg3[%c0_26, %c2_27, %c0_28, %c0_29], %26 {strides = array<i32>} : memref<1x4x8x64xf32, #tpu.memory_space<vmem>>, vector<1x1x8x64xf32>,
    %c0_30 = arith.constant 0 : index
    %c0_31 = arith.constant 0 : index
    %c192 = arith.constant 192 : index
    %27 = vector.load %arg2[%c0_30, %c0_31, %c192] : memref<1x128x256xf32, #tpu.memory_space<vmem>>, vector<1x128x64xf32>
    %28 = vector.shape_cast %27 : vector<1x128x64xf32> to vector<128x64xf32>
    %29 = arith.truncf %28 : vector<128x64xf32> to vector<128x64xbf16>
    %c0_32 = arith.constant 0 : index
    %c3 = arith.constant 3 : index
    %c0_33 = arith.constant 0 : index
    %c0_34 = arith.constant 0 : index
    %30 = vector.load %arg1[%c0_32, %c3, %c0_33, %c0_34] : memref<1x4x8x128xbf16, #tpu.memory_space<vmem>>, vector<1x1x8x128xbf16>
    %31 = vector.shape_cast %30 : vector<1x1x8x128xbf16> to vector<8x128xbf16>
    %cst_35 = arith.constant dense<0.000000e+00> : vector<8x64xf32>
    %32 = tpu.matmul %31, %29, %cst_35 {dimension_numbers = #tpu.dot_dimension_numbers<[1], [0], [0], [1], [0, 0, 1, 1], [], []>} : vector<8x128xbf16>, vector<128x64xbf16>, vector<8x64xf32> -> vector<8x64xf32>
    %c0_36 = arith.constant 0 : index
    %c3_37 = arith.constant 3 : index
    %c0_38 = arith.constant 0 : index
    %c0_39 = arith.constant 0 : index
    %33 = vector.load %arg3[%c0_36, %c3_37, %c0_38, %c0_39] : memref<1x4x8x64xf32, #tpu.memory_space<vmem>>, vector<1x1x8x64xf32>
    %34 = vector.shape_cast %33 : vector<1x1x8x64xf32> to vector<8x64xf32>
    %35 = vector.shape_cast %32 : vector<8x64xf32> to vector<1x1x8x64xf32>
    tpu.vector_store %arg3[%c0_36, %c3_37, %c0_38, %c0_39], %35 {strides = array<i32>} : memref<1x4x8x64xf32, #tpu.memory_space<vmem>>, vector<1x1x8x64xf32>,
    return
  }
  func.func @transform_0(%arg0: i32) -> (i32, i32, i32, i32) {
    %c0_i32 = arith.constant 0 : i32
    %c0_i32_0 = arith.constant 0 : i32
    %c0_i32_1 = arith.constant 0 : i32
    %c0_i32_2 = arith.constant 0 : i32
    return %arg0, %c0_i32, %c0_i32_0, %c0_i32_1 : i32, i32, i32, i32
  }
  func.func @transform_1(%arg0: i32) -> (i32, i32, i32) {
    %c0_i32 = arith.constant 0 : i32
    %c0_i32_0 = arith.constant 0 : i32
    %c0_i32_1 = arith.constant 0 : i32
    return %arg0, %c0_i32, %c0_i32_0 : i32, i32, i32
  }
  func.func @transform_2(%arg0: i32) -> (i32, i32, i32, i32) {
    %c0_i32 = arith.constant 0 : i32
    %c0_i32_0 = arith.constant 0 : i32
    %c0_i32_1 = arith.constant 0 : i32
    %c0_i32_2 = arith.constant 0 : i32
    return %arg0, %c0_i32, %c0_i32_0, %c0_i32_1 : i32, i32, i32, i32
  }
}

module attributes {stable_mosaic.version = 11 : i64} {
  func.func @_qk_kernel(%arg0: i32, %arg1: i32, %arg2: memref<1x4x8x64xbf16, #tpu.memory_space<vmem>>, %arg3: memref<1x128x256xf32, #tpu.memory_space<vmem>>, %arg4: memref<1x4x8x128xf32, #tpu.memory_space<vmem>>) attributes {dimension_semantics = [#tpu.dimension_semantics<parallel>, #tpu.dimension_semantics<parallel>], iteration_bounds = array<i64: 2, 2>, scalar_prefetch = 0 : i64, scratch_operands = 0 : i64, tpu.core_type = #tpu.core_type<tc>, window_params = [{transform_indices = @transform_0, window_bounds = array<i64: 1, 4, 8, 64>}, {transform_indices = @transform_1, window_bounds = array<i64: 1, 128, 256>}, {transform_indices = @transform_2, window_bounds = array<i64: 1, 4, 8, 128>}]} {
    %c0 = arith.constant 0 : index
    %c0_0 = arith.constant 0 : index
    %c0_1 = arith.constant 0 : index
    %0 = vector.load %arg3[%c0, %c0_0, %c0_1] : memref<1x128x256xf32, #tpu.memory_space<vmem>>, vector<1x128x64xf32>
    %1 = vector.shape_cast %0 : vector<1x128x64xf32> to vector<128x64xf32>
    %2 = arith.truncf %1 : vector<128x64xf32> to vector<128x64xbf16>
    %c0_2 = arith.constant 0 : index
    %c0_3 = arith.constant 0 : index
    %c0_4 = arith.constant 0 : index
    %c0_5 = arith.constant 0 : index
    %3 = vector.load %arg2[%c0_2, %c0_3, %c0_4, %c0_5] : memref<1x4x8x64xbf16, #tpu.memory_space<vmem>>, vector<1x1x8x64xbf16>
    %4 = vector.shape_cast %3 : vector<1x1x8x64xbf16> to vector<8x64xbf16>
    "tpu.trace_start"() <{level = 10 : i32, message = "ce,se->cs"}> : () -> ()
    %cst = arith.constant dense<0.000000e+00> : vector<8x128xf32>
    %5 = tpu.matmul %4, %2, %cst {dimension_numbers = #tpu.dot_dimension_numbers<[1], [1], [0], [0], [0, 0, 1, 0], [], []>} : vector<8x64xbf16>, vector<128x64xbf16>, vector<8x128xf32> -> vector<8x128xf32>
    "tpu.trace_stop"() : () -> ()
    %c0_6 = arith.constant 0 : index
    %c0_7 = arith.constant 0 : index
    %c0_8 = arith.constant 0 : index
    %c0_9 = arith.constant 0 : index
    %6 = vector.load %arg4[%c0_6, %c0_7, %c0_8, %c0_9] : memref<1x4x8x128xf32, #tpu.memory_space<vmem>>, vector<1x1x8x128xf32>
    %7 = vector.shape_cast %6 : vector<1x1x8x128xf32> to vector<8x128xf32>
    %8 = vector.shape_cast %5 : vector<8x128xf32> to vector<1x1x8x128xf32>
    tpu.vector_store %arg4[%c0_6, %c0_7, %c0_8, %c0_9], %8 {strides = array<i32>} : memref<1x4x8x128xf32, #tpu.memory_space<vmem>>, vector<1x1x8x128xf32>,
    %c0_10 = arith.constant 0 : index
    %c0_11 = arith.constant 0 : index
    %c64 = arith.constant 64 : index
    %9 = vector.load %arg3[%c0_10, %c0_11, %c64] : memref<1x128x256xf32, #tpu.memory_space<vmem>>, vector<1x128x64xf32>
    %10 = vector.shape_cast %9 : vector<1x128x64xf32> to vector<128x64xf32>
    %11 = arith.truncf %10 : vector<128x64xf32> to vector<128x64xbf16>
    %c0_12 = arith.constant 0 : index
    %c1 = arith.constant 1 : index
    %c0_13 = arith.constant 0 : index
    %c0_14 = arith.constant 0 : index
    %12 = vector.load %arg2[%c0_12, %c1, %c0_13, %c0_14] : memref<1x4x8x64xbf16, #tpu.memory_space<vmem>>, vector<1x1x8x64xbf16>
    %13 = vector.shape_cast %12 : vector<1x1x8x64xbf16> to vector<8x64xbf16>
    "tpu.trace_start"() <{level = 10 : i32, message = "ce,se->cs"}> : () -> ()
    %cst_15 = arith.constant dense<0.000000e+00> : vector<8x128xf32>
    %14 = tpu.matmul %13, %11, %cst_15 {dimension_numbers = #tpu.dot_dimension_numbers<[1], [1], [0], [0], [0, 0, 1, 0], [], []>} : vector<8x64xbf16>, vector<128x64xbf16>, vector<8x128xf32> -> vector<8x128xf32>
    "tpu.trace_stop"() : () -> ()
    %c0_16 = arith.constant 0 : index
    %c1_17 = arith.constant 1 : index
    %c0_18 = arith.constant 0 : index
    %c0_19 = arith.constant 0 : index
    %15 = vector.load %arg4[%c0_16, %c1_17, %c0_18, %c0_19] : memref<1x4x8x128xf32, #tpu.memory_space<vmem>>, vector<1x1x8x128xf32>
    %16 = vector.shape_cast %15 : vector<1x1x8x128xf32> to vector<8x128xf32>
    %17 = vector.shape_cast %14 : vector<8x128xf32> to vector<1x1x8x128xf32>
    tpu.vector_store %arg4[%c0_16, %c1_17, %c0_18, %c0_19], %17 {strides = array<i32>} : memref<1x4x8x128xf32, #tpu.memory_space<vmem>>, vector<1x1x8x128xf32>,
    %c0_20 = arith.constant 0 : index
    %c0_21 = arith.constant 0 : index
    %c128 = arith.constant 128 : index
    %18 = vector.load %arg3[%c0_20, %c0_21, %c128] : memref<1x128x256xf32, #tpu.memory_space<vmem>>, vector<1x128x64xf32>
    %19 = vector.shape_cast %18 : vector<1x128x64xf32> to vector<128x64xf32>
    %20 = arith.truncf %19 : vector<128x64xf32> to vector<128x64xbf16>
    %c0_22 = arith.constant 0 : index
    %c2 = arith.constant 2 : index
    %c0_23 = arith.constant 0 : index
    %c0_24 = arith.constant 0 : index
    %21 = vector.load %arg2[%c0_22, %c2, %c0_23, %c0_24] : memref<1x4x8x64xbf16, #tpu.memory_space<vmem>>, vector<1x1x8x64xbf16>
    %22 = vector.shape_cast %21 : vector<1x1x8x64xbf16> to vector<8x64xbf16>
    "tpu.trace_start"() <{level = 10 : i32, message = "ce,se->cs"}> : () -> ()
    %cst_25 = arith.constant dense<0.000000e+00> : vector<8x128xf32>
    %23 = tpu.matmul %22, %20, %cst_25 {dimension_numbers = #tpu.dot_dimension_numbers<[1], [1], [0], [0], [0, 0, 1, 0], [], []>} : vector<8x64xbf16>, vector<128x64xbf16>, vector<8x128xf32> -> vector<8x128xf32>
    "tpu.trace_stop"() : () -> ()
    %c0_26 = arith.constant 0 : index
    %c2_27 = arith.constant 2 : index
    %c0_28 = arith.constant 0 : index
    %c0_29 = arith.constant 0 : index
    %24 = vector.load %arg4[%c0_26, %c2_27, %c0_28, %c0_29] : memref<1x4x8x128xf32, #tpu.memory_space<vmem>>, vector<1x1x8x128xf32>
    %25 = vector.shape_cast %24 : vector<1x1x8x128xf32> to vector<8x128xf32>
    %26 = vector.shape_cast %23 : vector<8x128xf32> to vector<1x1x8x128xf32>
    tpu.vector_store %arg4[%c0_26, %c2_27, %c0_28, %c0_29], %26 {strides = array<i32>} : memref<1x4x8x128xf32, #tpu.memory_space<vmem>>, vector<1x1x8x128xf32>,
    %c0_30 = arith.constant 0 : index
    %c0_31 = arith.constant 0 : index
    %c192 = arith.constant 192 : index
    %27 = vector.load %arg3[%c0_30, %c0_31, %c192] : memref<1x128x256xf32, #tpu.memory_space<vmem>>, vector<1x128x64xf32>
    %28 = vector.shape_cast %27 : vector<1x128x64xf32> to vector<128x64xf32>
    %29 = arith.truncf %28 : vector<128x64xf32> to vector<128x64xbf16>
    %c0_32 = arith.constant 0 : index
    %c3 = arith.constant 3 : index
    %c0_33 = arith.constant 0 : index
    %c0_34 = arith.constant 0 : index
    %30 = vector.load %arg2[%c0_32, %c3, %c0_33, %c0_34] : memref<1x4x8x64xbf16, #tpu.memory_space<vmem>>, vector<1x1x8x64xbf16>
    %31 = vector.shape_cast %30 : vector<1x1x8x64xbf16> to vector<8x64xbf16>
    "tpu.trace_start"() <{level = 10 : i32, message = "ce,se->cs"}> : () -> ()
    %cst_35 = arith.constant dense<0.000000e+00> : vector<8x128xf32>
    %32 = tpu.matmul %31, %29, %cst_35 {dimension_numbers = #tpu.dot_dimension_numbers<[1], [1], [0], [0], [0, 0, 1, 0], [], []>} : vector<8x64xbf16>, vector<128x64xbf16>, vector<8x128xf32> -> vector<8x128xf32>
    "tpu.trace_stop"() : () -> ()
    %c0_36 = arith.constant 0 : index
    %c3_37 = arith.constant 3 : index
    %c0_38 = arith.constant 0 : index
    %c0_39 = arith.constant 0 : index
    %33 = vector.load %arg4[%c0_36, %c3_37, %c0_38, %c0_39] : memref<1x4x8x128xf32, #tpu.memory_space<vmem>>, vector<1x1x8x128xf32>
    %34 = vector.shape_cast %33 : vector<1x1x8x128xf32> to vector<8x128xf32>
    %35 = vector.shape_cast %32 : vector<8x128xf32> to vector<1x1x8x128xf32>
    tpu.vector_store %arg4[%c0_36, %c3_37, %c0_38, %c0_39], %35 {strides = array<i32>} : memref<1x4x8x128xf32, #tpu.memory_space<vmem>>, vector<1x1x8x128xf32>,
    return
  }
  func.func @transform_0(%arg0: i32, %arg1: i32) -> (i32, i32, i32, i32) {
    %c0_i32 = arith.constant 0 : i32
    %c0_i32_0 = arith.constant 0 : i32
    %c0_i32_1 = arith.constant 0 : i32
    %c0_i32_2 = arith.constant 0 : i32
    return %arg0, %c0_i32, %c0_i32_0, %c0_i32_1 : i32, i32, i32, i32
  }
  func.func @transform_1(%arg0: i32, %arg1: i32) -> (i32, i32, i32) {
    %c0_i32 = arith.constant 0 : i32
    %c0_i32_0 = arith.constant 0 : i32
    return %arg0, %arg1, %c0_i32 : i32, i32, i32
  }
  func.func @transform_2(%arg0: i32, %arg1: i32) -> (i32, i32, i32, i32) {
    %c0_i32 = arith.constant 0 : i32
    %c0_i32_0 = arith.constant 0 : i32
    %c0_i32_1 = arith.constant 0 : i32
    return %arg0, %c0_i32, %c0_i32_0, %arg1 : i32, i32, i32, i32
  }
}

</mosaic_0001>

<llo_original>
// kernel: simulated_clustered_attention_qk.3
$region0: #{simulated_clustered_attention_qk.3}
  #allocation0 [shape = 'u32[]', space=smem, size = 0x4, offset = 0x4, fixed_abs, tag = 'smem constant byte address 0x4 - core index']
  #allocation1 [shape = 'u32[144,128]{1,0:T(1,128)}', space=vmem, size = 0x12000, scoped, tag = 'internal scratch']
  %s0 = inlined_call_operand.vmem [shape: bf16[2,4,8,64], index: 0, kind: input, shape index: {}]
  %s1 = inlined_call_operand.vmem [shape: f32[2,224,256], index: 1, kind: input, shape index: {}]
  %s2 = inlined_call_operand.hbm [shape: f32[2,4,8,224], index: 2, kind: output, shape index: {}]
  %s3 = sld [smem:[#allocation0]]
  $region41: #{simulated_clustered_attention_qk.3} parent=0
    _
  %s5 = ssub.s32 1, %s3
  %s6 = scalar_select 0, %s5, %s3
  $region1: #{simulated_clustered_attention_qk.3} parent=0
    #allocation2 [shape = 'u8[32768]{0}', space=vmem, size = 0x8000, scoped, tag = 'output window, operand 0']
    #allocation3 [shape = 's32[2]{0}', space=sflag, size = 0x8, scoped, tag = 'scoped memory for simulated_clustered_attention_qk.3']
    %7 = vsyncpa [#allocation3], 0
    %s8 = scalar_lea.sflag [#allocation3], 1
    %9 = vsyncpa %s8, 0
    loop: start=0, step=1, limit=6
    $region2: #{simulated_clustered_attention_qk.3} parent=1 // loop_pre_header
      _
    $region3: #{simulated_clustered_attention_qk.3} parent=1 // loop_header
      %s11 = sphi 0, %s15
      %p12 = scmp.ge.s32.totalorder %s11, 6
      %s18 = sphi 0, %s30
      %s19 = sphi 0, %s26
      %s20 = sphi 0, %s18
      %s21 = sphi 0, %s19
      %s22 = sphi 0, %s20
      %s23 = sphi 0, %s21
      %s33 = sphi 0, %s35
      %s36 = sphi 0, %s33
      %s37 = sphi 0, %s36
      %s53 = sphi 0, %s37
      %s61 = sphi 0, %s63
      %s64 = sphi 0, %s61
      %s65 = sphi 0, %s64
      %s81 = sphi 0, %s65
      %s89 = sphi 0, %s91
      %s92 = sphi 0, %s89
      %s93 = sphi 0, %s92
      %s109 = sphi 0, %s93
    $region4: #{simulated_clustered_attention_qk.3} parent=1 // loop_header_branch
      %14 = sbr.rel (%p12) target = $region8
    $region5: #{simulated_clustered_attention_qk.3} parent=1 // loop_body
      %s16 = ssub.s32 %s11, 1
      %s17 = ssub.s32 %s11, 2
      %s24 = sadd.s32 1, %s19
      %p25 = scmp.ge.s32.totalorder %s24, 2
      %s26 = scalar_select %p25, 0, %s24
      %s27 = sadd.s32 1, %s18
      %s28 = scalar_select %p25, %s27, %s18
      %p29 = scmp.ge.s32.totalorder %s28, 2
      %s30 = scalar_select %p29, 0, %s28
      %s31 = ssub.s32 %s18, %s30
      %p32 = scmp.eq.s32.totalorder %s31, 0
      %s34 = sadd.s32 %s33, 1
      %s35 = scalar_select %p32, %s33, %s34
      %p38 = pneg %p32
      %p39 = scmp.eq.s32.totalorder %s11, 3
      %p40 = por %p38, %p39
      %p41 = scmp.ne.s32.totalorder %s33, %s36
      %p42 = scmp.eq.s32.totalorder %s11, 0
      %p43 = por %p41, %p42
      %p44 = scmp.ne.s32.totalorder %s33, %s36
      %p45 = scmp.eq.s32.totalorder %s16, 3
      %p46 = por %p44, %p45
      %p47 = scmp.ne.s32.totalorder %s36, %s37
      %p48 = scmp.eq.s32.totalorder %s16, 0
      %p49 = por %p47, %p48
      %p50 = scmp.ne.s32.totalorder %s36, %s37
      %p51 = scmp.eq.s32.totalorder %s17, 3
      %p52 = por %p50, %p51
      %p54 = scmp.ne.s32.totalorder %s37, %s53
      %p55 = scmp.eq.s32.totalorder %s17, 0
      %p56 = por %p54, %p55
      %s57 = ssub.s32 %s18, %s30
      %s58 = ssub.s32 %s19, %s26
      %s59 = sor.u32 %s57, %s58
      %p60 = scmp.eq.s32.totalorder %s59, 0
      %s62 = sadd.s32 %s61, 1
      %s63 = scalar_select %p60, %s61, %s62
      %p66 = pneg %p60
      %p67 = scmp.eq.s32.totalorder %s11, 3
      %p68 = por %p66, %p67
      %p69 = scmp.ne.s32.totalorder %s61, %s64
      %p70 = scmp.eq.s32.totalorder %s11, 0
      %p71 = por %p69, %p70
      %p72 = scmp.ne.s32.totalorder %s61, %s64
      %p73 = scmp.eq.s32.totalorder %s16, 3
      %p74 = por %p72, %p73
      %p75 = scmp.ne.s32.totalorder %s64, %s65
      %p76 = scmp.eq.s32.totalorder %s16, 0
      %p77 = por %p75, %p76
      %p78 = scmp.ne.s32.totalorder %s64, %s65
      %p79 = scmp.eq.s32.totalorder %s17, 3
      %p80 = por %p78, %p79
      %p82 = scmp.ne.s32.totalorder %s65, %s81
      %p83 = scmp.eq.s32.totalorder %s17, 0
      %p84 = por %p82, %p83
      %s85 = ssub.s32 %s18, %s30
      %s86 = ssub.s32 %s19, %s26
      %s87 = sor.u32 %s85, %s86
      %p88 = scmp.eq.s32.totalorder %s87, 0
      %s90 = sadd.s32 %s89, 1
      %s91 = scalar_select %p88, %s89, %s90
      %p94 = pneg %p88
      %p95 = scmp.eq.s32.totalorder %s11, 3
      %p96 = por %p94, %p95
      %p97 = scmp.ne.s32.totalorder %s89, %s92
      %p98 = scmp.eq.s32.totalorder %s11, 0
      %p99 = por %p97, %p98
      %p100 = scmp.ne.s32.totalorder %s89, %s92
      %p101 = scmp.eq.s32.totalorder %s16, 3
      %p102 = por %p100, %p101
      %p103 = scmp.ne.s32.totalorder %s92, %s93
      %p104 = scmp.eq.s32.totalorder %s16, 0
      %p105 = por %p103, %p104
      %p106 = scmp.ne.s32.totalorder %s92, %s93
      %p107 = scmp.eq.s32.totalorder %s17, 3
      %p108 = por %p106, %p107
      %p110 = scmp.ne.s32.totalorder %s93, %s109
      %p111 = scmp.eq.s32.totalorder %s17, 0
      %p112 = por %p110, %p111
      %p113 = scmp.le.s32.totalorder 1, %s11
      %p114 = scmp.lt.s32.totalorder %s11, 5
      %p115 = pnand %p113, %p114
      %p116 = pneg %p115
      // Predicated region
      $region9: #{simulated_clustered_attention_qk.3} parent=5 // pred_check
        _
      $region10: #{simulated_clustered_attention_qk.3} parent=5 // pred_check_branch
        %118 = sbr.rel (%p115) target = $region12
      $region11: #{simulated_clustered_attention_qk.3} parent=5 // pred_region
        %s119 = ssub.s32 %s11, 1
      $region12: #{simulated_clustered_attention_qk.3} parent=5 // pred_fallthru
        _
      %p120 = scmp.lt.s32.totalorder %s11, 4
      // Predicated region
      $region13: #{simulated_clustered_attention_qk.3} parent=5 // pred_check
        %p121 = pneg %p120
      $region14: #{simulated_clustered_attention_qk.3} parent=5 // pred_check_branch
        %123 = sbr.rel (%p121) target = $region16
      $region15: #{simulated_clustered_attention_qk.3} parent=5 // pred_region
        // Predicated region
        $region17: #{simulated_clustered_attention_qk.3} parent=15 // pred_check
          %p124 = pneg %p43
        $region18: #{simulated_clustered_attention_qk.3} parent=15 // pred_check_branch
          %126 = sbr.rel (%p124) target = $region20
        $region19: #{simulated_clustered_attention_qk.3} parent=15 // pred_region
          %p127 = scmp.lt.s32.totalorder %s18, 1
          %s128 = scalar_select %p127, %s18, 1
          %s129 = smul.addr %s128, 4
          %s130 = smul.addr %s129, 4
          %s131 = scalar_lea.vmem %s0, %s130
        $region20: #{simulated_clustered_attention_qk.3} parent=15 // pred_fallthru
          _
        // Predicated region
        $region21: #{simulated_clustered_attention_qk.3} parent=15 // pred_check
          %p132 = pneg %p71
        $region22: #{simulated_clustered_attention_qk.3} parent=15 // pred_check_branch
          %134 = sbr.rel (%p132) target = $region24
        $region23: #{simulated_clustered_attention_qk.3} parent=15 // pred_region
          %s135 = smul.u32 16, %s19
          %s136 = ssub.s32 28, %s135
          %p137 = scmp.lt.s32.totalorder %s136, 16
          %s138 = scalar_select %p137, %s136, 16
          %s139 = smul.u32 128, %s138
          %s140 = smul.u32 %s139, 2
          %p141 = scmp.lt.s32.totalorder %s18, 1
          %s142 = scalar_select %p141, %s18, 1
          %p143 = scmp.lt.s32.totalorder %s135, 27
          %s144 = scalar_select %p143, %s135, 27
          %s145 = smul.addr %s144, 2
          %s146 = smul.addr %s142, 56
          %s147 = sadd.s32 %s145, %s146
          %s148 = smul.addr %s147, 8
          %s149 = scalar_lea.vmem %s1, %s148
          %s150 = smul.u32 16, %s19
          %s151 = ssub.s32 28, %s150
          %p152 = scmp.lt.s32.totalorder %s151, 16
          %s153 = scalar_select %p152, %s151, 16
          %s154 = smul.u32 128, %s153
          %s155 = smul.u32 %s154, 2
        $region24: #{simulated_clustered_attention_qk.3} parent=15 // pred_fallthru
          _
      $region16: #{simulated_clustered_attention_qk.3} parent=5 // pred_fallthru
        _
      %p156 = scmp.le.s32.totalorder 1, %s11
      %p157 = scmp.lt.s32.totalorder %s11, 5
      %p158 = pnand %p156, %p157
      %p159 = pneg %p158
      // Predicated region
      $region25: #{simulated_clustered_attention_qk.3} parent=5 // pred_check
        _
      $region26: #{simulated_clustered_attention_qk.3} parent=5 // pred_check_branch
        %161 = sbr.rel (%p158) target = $region28
      $region27: #{simulated_clustered_attention_qk.3} parent=5 // pred_region
        %s162 = ssub.s32 %s11, 1
        %p163 = scmp.lt.s32.totalorder %s20, 1
        %s164 = scalar_select %p163, %s20, 1
        %s165 = smul.addr %s164, 4
        %s166 = smul.addr %s165, 4
        %s167 = scalar_lea.vmem %s0, %s166
        %p168 = pneg %p49
        %p169 = pneg %p46
        %s170 = smul.u32 16, %s21
        %s171 = ssub.s32 28, %s170
        %p172 = scmp.lt.s32.totalorder %s171, 16
        %s173 = scalar_select %p172, %s171, 16
        %s174 = smul.u32 128, %s173
        %s175 = smul.u32 %s174, 2
        %p176 = scmp.lt.s32.totalorder %s20, 1
        %s177 = scalar_select %p176, %s20, 1
        %p178 = scmp.lt.s32.totalorder %s170, 27
        %s179 = scalar_select %p178, %s170, 27
        %s180 = smul.addr %s179, 2
        %s181 = smul.addr %s177, 56
        %s182 = sadd.s32 %s180, %s181
        %s183 = smul.addr %s182, 8
        %s184 = scalar_lea.vmem %s1, %s183
        %p185 = pneg %p77
        %p186 = pneg %p74
        %p187 = pneg %p105
        %p188 = pneg %p102
        %s189 = sand.u32 %s92, 1
        %s190 = scalar_lea.sflag [#allocation3], %s189
        %s191 = sand.u32 %s92, 1
        %s192 = smul.addr %s191, 32
        %s193 = scalar_lea.vmem [#allocation2], %s192
        %p194 = scmp.lt.s32.totalorder %s20, 1
        %s195 = scalar_select %p194, %s20, 1
        %s196 = smul.addr %s195, 4
        %s197 = smul.addr %s196, 4
        %s198 = scalar_lea.vmem %s0, %s197
        %s199 = smul.u32 16, %s21
        %s200 = ssub.s32 28, %s199
        %p201 = scmp.lt.s32.totalorder %s200, 16
        %s202 = scalar_select %p201, %s200, 16
        %s203 = smul.u32 128, %s202
        %s204 = smul.u32 %s203, 2
        %p205 = scmp.lt.s32.totalorder %s20, 1
        %s206 = scalar_select %p205, %s20, 1
        %p207 = scmp.lt.s32.totalorder %s199, 27
        %s208 = scalar_select %p207, %s199, 27
        %s209 = smul.addr %s208, 2
        %s210 = smul.addr %s206, 56
        %s211 = sadd.s32 %s209, %s210
        %s212 = smul.addr %s211, 8
        %s213 = scalar_lea.vmem %s1, %s212
        %s214 = smul.u32 16, %s21
        %s215 = ssub.s32 28, %s214
        %p216 = scmp.lt.s32.totalorder %s215, 16
        %s217 = scalar_select %p216, %s215, 16
        %s218 = smul.u32 128, %s217
        %s219 = smul.u32 %s218, 2
        %v221 = vld [vmem:[%s213] sm:$0xff]
        %v222 = vld [vmem:[%s213 + $0x10] sm:$0xff]
        %v223 = vld [vmem:[%s213 + $0x20] sm:$0xff]
        %v224 = vld [vmem:[%s213 + $0x30] sm:$0xff]
        %v225 = vld [vmem:[%s213 + $0x40] sm:$0xff]
        %v226 = vld [vmem:[%s213 + $0x50] sm:$0xff]
        %v227 = vld [vmem:[%s213 + $0x60] sm:$0xff]
        %v228 = vld [vmem:[%s213 + $0x70] sm:$0xff]
        %v229 = vld [vmem:[%s213 + $0x80] sm:$0xff]
        %v230 = vld [vmem:[%s213 + $0x90] sm:$0xff]
        %v231 = vld [vmem:[%s213 + $0xa0] sm:$0xff]
        %v232 = vld [vmem:[%s213 + $0xb0] sm:$0xff]
        %v233 = vld [vmem:[%s213 + $0xc0] sm:$0xff]
        %v234 = vld [vmem:[%s213 + $0xd0] sm:$0xff]
        %v235 = vld [vmem:[%s213 + $0xe0] sm:$0xff]
        %v236 = vld [vmem:[%s213 + $0xf0] sm:$0xff]
        %v237 = vpack.c.bf16 %v222, %v221
        %v238 = vpack.c.bf16 %v224, %v223
        %v239 = vpack.c.bf16 %v226, %v225
        %v240 = vpack.c.bf16 %v228, %v227
        %v241 = vpack.c.bf16 %v230, %v229
        %v242 = vpack.c.bf16 %v232, %v231
        %v243 = vpack.c.bf16 %v234, %v233
        %v244 = vpack.c.bf16 %v236, %v235
        %v245 = vld [vmem:[%s198] sm:$0xf]
        %vm246 = vcmask 523264
        %v248 = vsel %vm246, %v245, 0
        %v251 = vsel %vm246, %v237, 0
        %v254 = vsel %vm246, %v238, 0
        %v257 = vsel %vm246, %v239, 0
        %v260 = vsel %vm246, %v240, 0
        %v263 = vsel %vm246, %v241, 0
        %v266 = vsel %vm246, %v242, 0
        %v269 = vsel %vm246, %v243, 0
        %v272 = vsel %vm246, %v244, 0
        %274 = vmatprep.subr.bf16.mxu0 0
        %275 = vmatpush1.bf16.xpose.msra.mxu0 %v272
        %276 = vmatprep.subr.bf16.mxu0 0
        %277 = vmatpush1.bf16.xpose.msra.mxu0 %v269
        %278 = vmatprep.subr.bf16.mxu0 0
        %279 = vmatpush1.bf16.xpose.msra.mxu0 %v266
        %280 = vmatprep.subr.bf16.mxu0 0
        %281 = vmatpush1.bf16.xpose.msra.mxu0 %v263
        %282 = vmatprep.subr.bf16.mxu0 0
        %283 = vmatpush1.bf16.xpose.msra.mxu0 %v260
        %284 = vmatprep.subr.bf16.mxu0 0
        %285 = vmatpush1.bf16.xpose.msra.mxu0 %v257
        %286 = vmatprep.subr.bf16.mxu0 0
        %287 = vmatpush1.bf16.xpose.msra.mxu0 %v254
        %288 = vmatprep.subr.bf16.mxu0 0
        %289 = vmatpush1.bf16.xpose.msra.mxu0 %v251
        %290 = vmatprep.subr.bf16.mxu0 0
        %291 = vmatpush2.bf16.xpose.msra.mxu0 0
        %292 = vmatprep.subr.bf16.mxu0 0
        %293 = vmatpush2.bf16.xpose.msra.mxu0 0
        %294 = vmatprep.subr.bf16.mxu0 0
        %295 = vmatpush2.bf16.xpose.msra.mxu0 0
        %296 = vmatprep.subr.bf16.mxu0 0
        %297 = vmatpush2.bf16.xpose.msra.mxu0 0
        %298 = vmatprep.subr.bf16.mxu0 0
        %299 = vmatpush2.bf16.xpose.msra.mxu0 0
        %300 = vmatprep.subr.bf16.mxu0 0
        %301 = vmatpush2.bf16.xpose.msra.mxu0 0
        %302 = vmatprep.subr.bf16.mxu0 0
        %303 = vmatpush2.bf16.xpose.msra.mxu0 0
        %304 = vmatprep.subr.bf16.mxu0 0
        %305 = vmatpush2.bf16.xpose.msra.mxu0 0
        %306 = vmatprep.mubr.bf16.mxu0 0
        %307 = vmatmul.mubr.bf16.gmra.mxu0 %v248
        %v308 = vpop.f32.mrf.mxu0
        %v309 = vadd.f32 0.0, %v308
        %v310 = vpop.f32.mrf.mxu0
        %v311 = vpop.f32.mrf.mxu0
        %v312 = vpop.f32.mrf.mxu0
        %313 = vdwg.mxu0
        %314 = vst [vmem:[%s193] sm:$0xff] %v309
        %v315 = vld [vmem:[%s213] sm:$0xff]
        %v316 = vld [vmem:[%s213 + $0x10] sm:$0xff]
        %v317 = vld [vmem:[%s213 + $0x20] sm:$0xff]
        %v318 = vld [vmem:[%s213 + $0x30] sm:$0xff]
        %v319 = vld [vmem:[%s213 + $0x40] sm:$0xff]
        %v320 = vld [vmem:[%s213 + $0x50] sm:$0xff]
        %v321 = vld [vmem:[%s213 + $0x60] sm:$0xff]
        %v322 = vld [vmem:[%s213 + $0x70] sm:$0xff]
        %v323 = vld [vmem:[%s213 + $0x80] sm:$0xff]
        %v324 = vld [vmem:[%s213 + $0x90] sm:$0xff]
        %v325 = vld [vmem:[%s213 + $0xa0] sm:$0xff]
        %v326 = vld [vmem:[%s213 + $0xb0] sm:$0xff]
        %v327 = vld [vmem:[%s213 + $0xc0] sm:$0xff]
        %v328 = vld [vmem:[%s213 + $0xd0] sm:$0xff]
        %v329 = vld [vmem:[%s213 + $0xe0] sm:$0xff]
        %v330 = vld [vmem:[%s213 + $0xf0] sm:$0xff]
        %v331 = vpack.c.bf16 %v316, %v315
        %v332 = vpack.c.bf16 %v318, %v317
        %v333 = vpack.c.bf16 %v320, %v319
        %v334 = vpack.c.bf16 %v322, %v321
        %v335 = vpack.c.bf16 %v324, %v323
        %v336 = vpack.c.bf16 %v326, %v325
        %v337 = vpack.c.bf16 %v328, %v327
        %v338 = vpack.c.bf16 %v330, %v329
        %s339 = scalar_lea.vmem %s198, 4
        %v340 = vld [vmem:[%s339] sm:$0xf]
        %349 = vrot.lane.b32.xlu0 %v331, 64
        %v350 = vpop.permute.xlu0 %349
        %351 = vrot.lane.b32.xlu0 %v332, 64
        %v352 = vpop.permute.xlu0 %351
        %353 = vrot.lane.b32.xlu0 %v333, 64
        %v354 = vpop.permute.xlu0 %353
        %355 = vrot.lane.b32.xlu0 %v334, 64
        %v356 = vpop.permute.xlu0 %355
        %357 = vrot.lane.b32.xlu0 %v335, 64
        %v358 = vpop.permute.xlu0 %357
        %359 = vrot.lane.b32.xlu0 %v336, 64
        %v360 = vpop.permute.xlu0 %359
        %361 = vrot.lane.b32.xlu0 %v337, 64
        %v362 = vpop.permute.xlu0 %361
        %363 = vrot.lane.b32.xlu0 %v338, 64
        %v364 = vpop.permute.xlu0 %363
        %v366 = vsel %vm246, %v340, 0
        %v369 = vsel %vm246, %v350, 0
        %v372 = vsel %vm246, %v352, 0
        %v375 = vsel %vm246, %v354, 0
        %v378 = vsel %vm246, %v356, 0
        %v381 = vsel %vm246, %v358, 0
        %v384 = vsel %vm246, %v360, 0
        %v387 = vsel %vm246, %v362, 0
        %v390 = vsel %vm246, %v364, 0
        %392 = vmatprep.subr.bf16.mxu0 0
        %393 = vmatpush1.bf16.xpose.msra.mxu0 %v390
        %394 = vmatprep.subr.bf16.mxu0 0
        %395 = vmatpush1.bf16.xpose.msra.mxu0 %v387
        %396 = vmatprep.subr.bf16.mxu0 0
        %397 = vmatpush1.bf16.xpose.msra.mxu0 %v384
        %398 = vmatprep.subr.bf16.mxu0 0
        %399 = vmatpush1.bf16.xpose.msra.mxu0 %v381
        %400 = vmatprep.subr.bf16.mxu0 0
        %401 = vmatpush1.bf16.xpose.msra.mxu0 %v378
        %402 = vmatprep.subr.bf16.mxu0 0
        %403 = vmatpush1.bf16.xpose.msra.mxu0 %v375
        %404 = vmatprep.subr.bf16.mxu0 0
        %405 = vmatpush1.bf16.xpose.msra.mxu0 %v372
        %406 = vmatprep.subr.bf16.mxu0 0
        %407 = vmatpush1.bf16.xpose.msra.mxu0 %v369
        %408 = vmatprep.subr.bf16.mxu0 0
        %409 = vmatpush2.bf16.xpose.msra.mxu0 0
        %410 = vmatprep.subr.bf16.mxu0 0
        %411 = vmatpush2.bf16.xpose.msra.mxu0 0
        %412 = vmatprep.subr.bf16.mxu0 0
        %413 = vmatpush2.bf16.xpose.msra.mxu0 0
        %414 = vmatprep.subr.bf16.mxu0 0
        %415 = vmatpush2.bf16.xpose.msra.mxu0 0
        %416 = vmatprep.subr.bf16.mxu0 0
        %417 = vmatpush2.bf16.xpose.msra.mxu0 0
        %418 = vmatprep.subr.bf16.mxu0 0
        %419 = vmatpush2.bf16.xpose.msra.mxu0 0
        %420 = vmatprep.subr.bf16.mxu0 0
        %421 = vmatpush2.bf16.xpose.msra.mxu0 0
        %422 = vmatprep.subr.bf16.mxu0 0
        %423 = vmatpush2.bf16.xpose.msra.mxu0 0
        %424 = vmatprep.mubr.bf16.mxu0 0
        %425 = vmatmul.mubr.bf16.gmra.mxu0 %v366
        %v426 = vpop.f32.mrf.mxu0
        %v427 = vadd.f32 0.0, %v426
        %v428 = vpop.f32.mrf.mxu0
        %v429 = vpop.f32.mrf.mxu0
        %v430 = vpop.f32.mrf.mxu0
        %431 = vdwg.mxu0
        %s432 = scalar_lea.vmem %s193, 8 [#allocation2]
        %433 = vst [vmem:[%s432] sm:$0xff] %v427
        %v434 = vld [vmem:[%s213 + $0x8] sm:$0xff]
        %v435 = vld [vmem:[%s213 + $0x18] sm:$0xff]
        %v436 = vld [vmem:[%s213 + $0x28] sm:$0xff]
        %v437 = vld [vmem:[%s213 + $0x38] sm:$0xff]
        %v438 = vld [vmem:[%s213 + $0x48] sm:$0xff]
        %v439 = vld [vmem:[%s213 + $0x58] sm:$0xff]
        %v440 = vld [vmem:[%s213 + $0x68] sm:$0xff]
        %v441 = vld [vmem:[%s213 + $0x78] sm:$0xff]
        %v442 = vld [vmem:[%s213 + $0x88] sm:$0xff]
        %v443 = vld [vmem:[%s213 + $0x98] sm:$0xff]
        %v444 = vld [vmem:[%s213 + $0xa8] sm:$0xff]
        %v445 = vld [vmem:[%s213 + $0xb8] sm:$0xff]
        %v446 = vld [vmem:[%s213 + $0xc8] sm:$0xff]
        %v447 = vld [vmem:[%s213 + $0xd8] sm:$0xff]
        %v448 = vld [vmem:[%s213 + $0xe8] sm:$0xff]
        %v449 = vld [vmem:[%s213 + $0xf8] sm:$0xff]
        %v450 = vpack.c.bf16 %v435, %v434
        %v451 = vpack.c.bf16 %v437, %v436
        %v452 = vpack.c.bf16 %v439, %v438
        %v453 = vpack.c.bf16 %v441, %v440
        %v454 = vpack.c.bf16 %v443, %v442
        %v455 = vpack.c.bf16 %v445, %v444
        %v456 = vpack.c.bf16 %v447, %v446
        %v457 = vpack.c.bf16 %v449, %v448
        %s458 = scalar_lea.vmem %s198, 8
        %v459 = vld [vmem:[%s458] sm:$0xf]
        %v461 = vsel %vm246, %v459, 0
        %v464 = vsel %vm246, %v450, 0
        %v467 = vsel %vm246, %v451, 0
        %v470 = vsel %vm246, %v452, 0
        %v473 = vsel %vm246, %v453, 0
        %v476 = vsel %vm246, %v454, 0
        %v479 = vsel %vm246, %v455, 0
        %v482 = vsel %vm246, %v456, 0
        %v485 = vsel %vm246, %v457, 0
        %487 = vmatprep.subr.bf16.mxu0 0
        %488 = vmatpush1.bf16.xpose.msra.mxu0 %v485
        %489 = vmatprep.subr.bf16.mxu0 0
        %490 = vmatpush1.bf16.xpose.msra.mxu0 %v482
        %491 = vmatprep.subr.bf16.mxu0 0
        %492 = vmatpush1.bf16.xpose.msra.mxu0 %v479
        %493 = vmatprep.subr.bf16.mxu0 0
        %494 = vmatpush1.bf16.xpose.msra.mxu0 %v476
        %495 = vmatprep.subr.bf16.mxu0 0
        %496 = vmatpush1.bf16.xpose.msra.mxu0 %v473
        %497 = vmatprep.subr.bf16.mxu0 0
        %498 = vmatpush1.bf16.xpose.msra.mxu0 %v470
        %499 = vmatprep.subr.bf16.mxu0 0
        %500 = vmatpush1.bf16.xpose.msra.mxu0 %v467
        %501 = vmatprep.subr.bf16.mxu0 0
        %502 = vmatpush1.bf16.xpose.msra.mxu0 %v464
        %503 = vmatprep.subr.bf16.mxu0 0
        %504 = vmatpush2.bf16.xpose.msra.mxu0 0
        %505 = vmatprep.subr.bf16.mxu0 0
        %506 = vmatpush2.bf16.xpose.msra.mxu0 0
        %507 = vmatprep.subr.bf16.mxu0 0
        %508 = vmatpush2.bf16.xpose.msra.mxu0 0
        %509 = vmatprep.subr.bf16.mxu0 0
        %510 = vmatpush2.bf16.xpose.msra.mxu0 0
        %511 = vmatprep.subr.bf16.mxu0 0
        %512 = vmatpush2.bf16.xpose.msra.mxu0 0
        %513 = vmatprep.subr.bf16.mxu0 0
        %514 = vmatpush2.bf16.xpose.msra.mxu0 0
        %515 = vmatprep.subr.bf16.mxu0 0
        %516 = vmatpush2.bf16.xpose.msra.mxu0 0
        %517 = vmatprep.subr.bf16.mxu0 0
        %518 = vmatpush2.bf16.xpose.msra.mxu0 0
        %519 = vmatprep.mubr.bf16.mxu0 0
        %520 = vmatmul.mubr.bf16.gmra.mxu0 %v461
        %v521 = vpop.f32.mrf.mxu0
        %v522 = vadd.f32 0.0, %v521
        %v523 = vpop.f32.mrf.mxu0
        %v524 = vpop.f32.mrf.mxu0
        %v525 = vpop.f32.mrf.mxu0
        %526 = vdwg.mxu0
        %s527 = scalar_lea.vmem %s193, 16 [#allocation2]
        %528 = vst [vmem:[%s527] sm:$0xff] %v522
        %v529 = vld [vmem:[%s213 + $0x8] sm:$0xff]
        %v530 = vld [vmem:[%s213 + $0x18] sm:$0xff]
        %v531 = vld [vmem:[%s213 + $0x28] sm:$0xff]
        %v532 = vld [vmem:[%s213 + $0x38] sm:$0xff]
        %v533 = vld [vmem:[%s213 + $0x48] sm:$0xff]
        %v534 = vld [vmem:[%s213 + $0x58] sm:$0xff]
        %v535 = vld [vmem:[%s213 + $0x68] sm:$0xff]
        %v536 = vld [vmem:[%s213 + $0x78] sm:$0xff]
        %v537 = vld [vmem:[%s213 + $0x88] sm:$0xff]
        %v538 = vld [vmem:[%s213 + $0x98] sm:$0xff]
        %v539 = vld [vmem:[%s213 + $0xa8] sm:$0xff]
        %v540 = vld [vmem:[%s213 + $0xb8] sm:$0xff]
        %v541 = vld [vmem:[%s213 + $0xc8] sm:$0xff]
        %v542 = vld [vmem:[%s213 + $0xd8] sm:$0xff]
        %v543 = vld [vmem:[%s213 + $0xe8] sm:$0xff]
        %v544 = vld [vmem:[%s213 + $0xf8] sm:$0xff]
        %v545 = vpack.c.bf16 %v530, %v529
        %v546 = vpack.c.bf16 %v532, %v531
        %v547 = vpack.c.bf16 %v534, %v533
        %v548 = vpack.c.bf16 %v536, %v535
        %v549 = vpack.c.bf16 %v538, %v537
        %v550 = vpack.c.bf16 %v540, %v539
        %v551 = vpack.c.bf16 %v542, %v541
        %v552 = vpack.c.bf16 %v544, %v543
        %s553 = scalar_lea.vmem %s198, 12
        %v554 = vld [vmem:[%s553] sm:$0xf]
        %563 = vrot.lane.b32.xlu0 %v545, 64
        %v564 = vpop.permute.xlu0 %563
        %565 = vrot.lane.b32.xlu0 %v546, 64
        %v566 = vpop.permute.xlu0 %565
        %567 = vrot.lane.b32.xlu0 %v547, 64
        %v568 = vpop.permute.xlu0 %567
        %569 = vrot.lane.b32.xlu0 %v548, 64
        %v570 = vpop.permute.xlu0 %569
        %571 = vrot.lane.b32.xlu0 %v549, 64
        %v572 = vpop.permute.xlu0 %571
        %573 = vrot.lane.b32.xlu0 %v550, 64
        %v574 = vpop.permute.xlu0 %573
        %575 = vrot.lane.b32.xlu0 %v551, 64
        %v576 = vpop.permute.xlu0 %575
        %577 = vrot.lane.b32.xlu0 %v552, 64
        %v578 = vpop.permute.xlu0 %577
        %v580 = vsel %vm246, %v554, 0
        %v583 = vsel %vm246, %v564, 0
        %v586 = vsel %vm246, %v566, 0
        %v589 = vsel %vm246, %v568, 0
        %v592 = vsel %vm246, %v570, 0
        %v595 = vsel %vm246, %v572, 0
        %v598 = vsel %vm246, %v574, 0
        %v601 = vsel %vm246, %v576, 0
        %v604 = vsel %vm246, %v578, 0
        %606 = vmatprep.subr.bf16.mxu0 0
        %607 = vmatpush1.bf16.xpose.msra.mxu0 %v604
        %608 = vmatprep.subr.bf16.mxu0 0
        %609 = vmatpush1.bf16.xpose.msra.mxu0 %v601
        %610 = vmatprep.subr.bf16.mxu0 0
        %611 = vmatpush1.bf16.xpose.msra.mxu0 %v598
        %612 = vmatprep.subr.bf16.mxu0 0
        %613 = vmatpush1.bf16.xpose.msra.mxu0 %v595
        %614 = vmatprep.subr.bf16.mxu0 0
        %615 = vmatpush1.bf16.xpose.msra.mxu0 %v592
        %616 = vmatprep.subr.bf16.mxu0 0
        %617 = vmatpush1.bf16.xpose.msra.mxu0 %v589
        %618 = vmatprep.subr.bf16.mxu0 0
        %619 = vmatpush1.bf16.xpose.msra.mxu0 %v586
        %620 = vmatprep.subr.bf16.mxu0 0
        %621 = vmatpush1.bf16.xpose.msra.mxu0 %v583
        %622 = vmatprep.subr.bf16.mxu0 0
        %623 = vmatpush2.bf16.xpose.msra.mxu0 0
        %624 = vmatprep.subr.bf16.mxu0 0
        %625 = vmatpush2.bf16.xpose.msra.mxu0 0
        %626 = vmatprep.subr.bf16.mxu0 0
        %627 = vmatpush2.bf16.xpose.msra.mxu0 0
        %628 = vmatprep.subr.bf16.mxu0 0
        %629 = vmatpush2.bf16.xpose.msra.mxu0 0
        %630 = vmatprep.subr.bf16.mxu0 0
        %631 = vmatpush2.bf16.xpose.msra.mxu0 0
        %632 = vmatprep.subr.bf16.mxu0 0
        %633 = vmatpush2.bf16.xpose.msra.mxu0 0
        %634 = vmatprep.subr.bf16.mxu0 0
        %635 = vmatpush2.bf16.xpose.msra.mxu0 0
        %636 = vmatprep.subr.bf16.mxu0 0
        %637 = vmatpush2.bf16.xpose.msra.mxu0 0
        %638 = vmatprep.mubr.bf16.mxu0 0
        %639 = vmatmul.mubr.bf16.gmra.mxu0 %v580
        %v640 = vpop.f32.mrf.mxu0
        %v641 = vadd.f32 0.0, %v640
        %v642 = vpop.f32.mrf.mxu0
        %v643 = vpop.f32.mrf.mxu0
        %v644 = vpop.f32.mrf.mxu0
        %645 = vdwg.mxu0
        %s646 = scalar_lea.vmem %s193, 24 [#allocation2]
        %647 = vst [vmem:[%s646] sm:$0xff] %v641
        %s648 = sand.u32 %s92, 1
        %s649 = scalar_lea.sflag [#allocation3], %s648
        %s650 = sand.u32 %s92, 1
        %s651 = smul.addr %s650, 32
        %s652 = scalar_lea.vmem [#allocation2], %s651
        // Predicated region
        $region29: #{simulated_clustered_attention_qk.3} parent=27 // pred_check
          %p653 = pneg %p102
        $region30: #{simulated_clustered_attention_qk.3} parent=27 // pred_check_branch
          %655 = sbr.rel (%p653) target = $region32
        $region31: #{simulated_clustered_attention_qk.3} parent=27 // pred_region
          %s657 = ssub.s32 512, 512
          %658 = vsyncadd %s649, %s657
          %s659 = smul.addr %s20, 8
          %s660 = sadd.s32 %s21, %s659
          %s661 = smul.addr %s660, 128
          %s662 = scalar_lea.hbm %s2, %s661
          %s663 = sshll.u32 %s652, 4
          %s664 = int_to_ptr.vmem [resolvable:$true] %s663
          %669 = dma.vmem_to_hbm [thread:$0]  %s664, 512, %s662, %s649, 128, 256, 8
        $region32: #{simulated_clustered_attention_qk.3} parent=27 // pred_fallthru
          _
      $region28: #{simulated_clustered_attention_qk.3} parent=5 // pred_fallthru
        _
      %p670 = scmp.le.s32.totalorder 2, %s11
      // Predicated region
      $region33: #{simulated_clustered_attention_qk.3} parent=5 // pred_check
        %p671 = pneg %p670
      $region34: #{simulated_clustered_attention_qk.3} parent=5 // pred_check_branch
        %673 = sbr.rel (%p671) target = $region36
      $region35: #{simulated_clustered_attention_qk.3} parent=5 // pred_region
        %s674 = ssub.s32 %s11, 2
        // Predicated region
        $region37: #{simulated_clustered_attention_qk.3} parent=35 // pred_check
          %p675 = pneg %p108
        $region38: #{simulated_clustered_attention_qk.3} parent=35 // pred_check_branch
          %677 = sbr.rel (%p675) target = $region40
        $region39: #{simulated_clustered_attention_qk.3} parent=35 // pred_region
          %s678 = sand.u32 %s93, 1
          %s679 = scalar_lea.sflag [#allocation3], %s678
          %s680 = sand.u32 %s93, 1
          %s681 = smul.addr %s680, 32
          %s682 = scalar_lea.vmem [#allocation2], %s681
          %683 = dma.done %s679, 512
        $region40: #{simulated_clustered_attention_qk.3} parent=35 // pred_fallthru
          _
      $region36: #{simulated_clustered_attention_qk.3} parent=5 // pred_fallthru
        _
    $region6: #{simulated_clustered_attention_qk.3} parent=1 // loop_footer
      %s15 = sadd.s32 1, %s11
    $region7: #{simulated_clustered_attention_qk.3} parent=1 // loop_footer_branch
      %10 = sbr.rel target = $region3
    $region8: #{simulated_clustered_attention_qk.3} parent=1 // loop_exit
      _
    %684 = vsyncpa [#allocation3], 1
    %s685 = scalar_lea.sflag [#allocation3], 1
    %686 = vsyncpa %s685, 1

// kernel: simulated_clustered_attention_qk.2
$region0: #{simulated_clustered_attention_qk.2}
  #allocation0 [shape = 'u32[]', space=smem, size = 0x4, offset = 0x4, fixed_abs, tag = 'smem constant byte address 0x4 - core index']
  #allocation1 [shape = 'u32[144,128]{1,0:T(1,128)}', space=vmem, size = 0x12000, scoped, tag = 'internal scratch']
  %s0 = inlined_call_operand.vmem [shape: bf16[2,4,8,128], index: 0, kind: input, shape index: {}]
  %s1 = inlined_call_operand.vmem [shape: f32[2,128,256], index: 1, kind: input, shape index: {}]
  %s2 = inlined_call_operand.vmem [shape: f32[2,4,8,64], index: 2, kind: output, shape index: {}]
  %s3 = sld [smem:[#allocation0]]
  $region41: #{simulated_clustered_attention_qk.2} parent=0
    _
  %s5 = ssub.s32 1, %s3
  %s6 = scalar_select 0, %s5, %s3
  loop: start=0, step=1, limit=4
  $region2: #{simulated_clustered_attention_qk.2} parent=0 // loop_pre_header
    _
  $region3: #{simulated_clustered_attention_qk.2} parent=0 // loop_header
    %s8 = sphi 0, %s12
    %p9 = scmp.ge.s32.totalorder %s8, 4
    %s18 = sphi 0, %s20
    %s21 = sphi 0, %s18
    %s22 = sphi 0, %s21
    %s38 = sphi 0, %s22
    %s44 = sphi 0, %s46
    %s47 = sphi 0, %s44
    %s48 = sphi 0, %s47
    %s64 = sphi 0, %s48
    %s70 = sphi 0, %s72
    %s73 = sphi 0, %s70
    %s74 = sphi 0, %s73
    %s90 = sphi 0, %s74
  $region4: #{simulated_clustered_attention_qk.2} parent=0 // loop_header_branch
    %11 = sbr.rel (%p9) target = $region8
  $region5: #{simulated_clustered_attention_qk.2} parent=0 // loop_body
    %s13 = ssub.s32 %s8, 1
    %s14 = ssub.s32 %s8, 2
    %s15 = sadd.s32 %s8, 1
    %s16 = ssub.s32 %s8, %s15
    %p17 = scmp.eq.s32.totalorder %s16, 0
    %s19 = sadd.s32 %s18, 1
    %s20 = scalar_select %p17, %s18, %s19
    %p23 = pneg %p17
    %p24 = scmp.eq.s32.totalorder %s8, 1
    %p25 = por %p23, %p24
    %p26 = scmp.ne.s32.totalorder %s18, %s21
    %p27 = scmp.eq.s32.totalorder %s8, 0
    %p28 = por %p26, %p27
    %p29 = scmp.ne.s32.totalorder %s18, %s21
    %p30 = scmp.eq.s32.totalorder %s13, 1
    %p31 = por %p29, %p30
    %p32 = scmp.ne.s32.totalorder %s21, %s22
    %p33 = scmp.eq.s32.totalorder %s13, 0
    %p34 = por %p32, %p33
    %p35 = scmp.ne.s32.totalorder %s21, %s22
    %p36 = scmp.eq.s32.totalorder %s14, 1
    %p37 = por %p35, %p36
    %p39 = scmp.ne.s32.totalorder %s22, %s38
    %p40 = scmp.eq.s32.totalorder %s14, 0
    %p41 = por %p39, %p40
    %s42 = ssub.s32 %s8, %s15
    %p43 = scmp.eq.s32.totalorder %s42, 0
    %s45 = sadd.s32 %s44, 1
    %s46 = scalar_select %p43, %s44, %s45
    %p49 = pneg %p43
    %p50 = scmp.eq.s32.totalorder %s8, 1
    %p51 = por %p49, %p50
    %p52 = scmp.ne.s32.totalorder %s44, %s47
    %p53 = scmp.eq.s32.totalorder %s8, 0
    %p54 = por %p52, %p53
    %p55 = scmp.ne.s32.totalorder %s44, %s47
    %p56 = scmp.eq.s32.totalorder %s13, 1
    %p57 = por %p55, %p56
    %p58 = scmp.ne.s32.totalorder %s47, %s48
    %p59 = scmp.eq.s32.totalorder %s13, 0
    %p60 = por %p58, %p59
    %p61 = scmp.ne.s32.totalorder %s47, %s48
    %p62 = scmp.eq.s32.totalorder %s14, 1
    %p63 = por %p61, %p62
    %p65 = scmp.ne.s32.totalorder %s48, %s64
    %p66 = scmp.eq.s32.totalorder %s14, 0
    %p67 = por %p65, %p66
    %s68 = ssub.s32 %s8, %s15
    %p69 = scmp.eq.s32.totalorder %s68, 0
    %s71 = sadd.s32 %s70, 1
    %s72 = scalar_select %p69, %s70, %s71
    %p75 = pneg %p69
    %p76 = scmp.eq.s32.totalorder %s8, 1
    %p77 = por %p75, %p76
    %p78 = scmp.ne.s32.totalorder %s70, %s73
    %p79 = scmp.eq.s32.totalorder %s8, 0
    %p80 = por %p78, %p79
    %p81 = scmp.ne.s32.totalorder %s70, %s73
    %p82 = scmp.eq.s32.totalorder %s13, 1
    %p83 = por %p81, %p82
    %p84 = scmp.ne.s32.totalorder %s73, %s74
    %p85 = scmp.eq.s32.totalorder %s13, 0
    %p86 = por %p84, %p85
    %p87 = scmp.ne.s32.totalorder %s73, %s74
    %p88 = scmp.eq.s32.totalorder %s14, 1
    %p89 = por %p87, %p88
    %p91 = scmp.ne.s32.totalorder %s74, %s90
    %p92 = scmp.eq.s32.totalorder %s14, 0
    %p93 = por %p91, %p92
    %p94 = scmp.le.s32.totalorder 1, %s8
    %p95 = scmp.lt.s32.totalorder %s8, 3
    %p96 = pnand %p94, %p95
    %p97 = pneg %p96
    // Predicated region
    $region9: #{simulated_clustered_attention_qk.2} parent=5 // pred_check
      _
    $region10: #{simulated_clustered_attention_qk.2} parent=5 // pred_check_branch
      %99 = sbr.rel (%p96) target = $region12
    $region11: #{simulated_clustered_attention_qk.2} parent=5 // pred_region
      %s100 = ssub.s32 %s8, 1
    $region12: #{simulated_clustered_attention_qk.2} parent=5 // pred_fallthru
      _
    %p101 = scmp.lt.s32.totalorder %s8, 2
    // Predicated region
    $region13: #{simulated_clustered_attention_qk.2} parent=5 // pred_check
      %p102 = pneg %p101
    $region14: #{simulated_clustered_attention_qk.2} parent=5 // pred_check_branch
      %104 = sbr.rel (%p102) target = $region16
    $region15: #{simulated_clustered_attention_qk.2} parent=5 // pred_region
      // Predicated region
      $region17: #{simulated_clustered_attention_qk.2} parent=15 // pred_check
        %p105 = pneg %p28
      $region18: #{simulated_clustered_attention_qk.2} parent=15 // pred_check_branch
        %107 = sbr.rel (%p105) target = $region20
      $region19: #{simulated_clustered_attention_qk.2} parent=15 // pred_region
        %p108 = scmp.lt.s32.totalorder %s8, 1
        %s109 = scalar_select %p108, %s8, 1
        %s110 = smul.addr %s109, 4
        %s111 = smul.addr %s110, 4
        %s112 = scalar_lea.vmem %s0, %s111
      $region20: #{simulated_clustered_attention_qk.2} parent=15 // pred_fallthru
        _
      // Predicated region
      $region21: #{simulated_clustered_attention_qk.2} parent=15 // pred_check
        %p113 = pneg %p54
      $region22: #{simulated_clustered_attention_qk.2} parent=15 // pred_check_branch
        %115 = sbr.rel (%p113) target = $region24
      $region23: #{simulated_clustered_attention_qk.2} parent=15 // pred_region
        %p116 = scmp.lt.s32.totalorder %s8, 1
        %s117 = scalar_select %p116, %s8, 1
        %s118 = smul.addr %s117, 32
        %s119 = smul.addr %s118, 8
        %s120 = scalar_lea.vmem %s1, %s119
      $region24: #{simulated_clustered_attention_qk.2} parent=15 // pred_fallthru
        _
    $region16: #{simulated_clustered_attention_qk.2} parent=5 // pred_fallthru
      _
    %p121 = scmp.le.s32.totalorder 1, %s8
    %p122 = scmp.lt.s32.totalorder %s8, 3
    %p123 = pnand %p121, %p122
    %p124 = pneg %p123
    // Predicated region
    $region25: #{simulated_clustered_attention_qk.2} parent=5 // pred_check
      _
    $region26: #{simulated_clustered_attention_qk.2} parent=5 // pred_check_branch
      %126 = sbr.rel (%p123) target = $region28
    $region27: #{simulated_clustered_attention_qk.2} parent=5 // pred_region
      %s127 = ssub.s32 %s8, 1
      %p128 = scmp.lt.s32.totalorder %s13, 1
      %s129 = scalar_select %p128, %s13, 1
      %s130 = smul.addr %s129, 4
      %s131 = smul.addr %s130, 4
      %s132 = scalar_lea.vmem %s0, %s131
      %p133 = pneg %p34
      %p134 = pneg %p31
      %p135 = scmp.lt.s32.totalorder %s13, 1
      %s136 = scalar_select %p135, %s13, 1
      %s137 = smul.addr %s136, 32
      %s138 = smul.addr %s137, 8
      %s139 = scalar_lea.vmem %s1, %s138
      %p140 = pneg %p60
      %p141 = pneg %p57
      %p142 = pneg %p86
      %p143 = pneg %p83
      %p144 = scmp.lt.s32.totalorder %s13, 1
      %s145 = scalar_select %p144, %s13, 1
      %s146 = smul.addr %s145, 4
      %s147 = smul.addr %s146, 8
      %s148 = scalar_lea.vmem %s2, %s147
      %p149 = scmp.lt.s32.totalorder %s13, 1
      %s150 = scalar_select %p149, %s13, 1
      %s151 = smul.addr %s150, 4
      %s152 = smul.addr %s151, 4
      %s153 = scalar_lea.vmem %s0, %s152
      %p154 = scmp.lt.s32.totalorder %s13, 1
      %s155 = scalar_select %p154, %s13, 1
      %s156 = smul.addr %s155, 32
      %s157 = smul.addr %s156, 8
      %s158 = scalar_lea.vmem %s1, %s157
      %p159 = scmp.lt.s32.totalorder %s13, 1
      %s160 = scalar_select %p159, %s13, 1
      %s161 = smul.addr %s160, 4
      %s162 = smul.addr %s161, 8
      %s163 = scalar_lea.vmem %s2, %s162
      %v165 = vld [vmem:[%s158] sm:$0xff]
      %v166 = vld [vmem:[%s158 + $0x10] sm:$0xff]
      %v167 = vld [vmem:[%s158 + $0x20] sm:$0xff]
      %v168 = vld [vmem:[%s158 + $0x30] sm:$0xff]
      %v169 = vld [vmem:[%s158 + $0x40] sm:$0xff]
      %v170 = vld [vmem:[%s158 + $0x50] sm:$0xff]
      %v171 = vld [vmem:[%s158 + $0x60] sm:$0xff]
      %v172 = vld [vmem:[%s158 + $0x70] sm:$0xff]
      %v173 = vld [vmem:[%s158 + $0x80] sm:$0xff]
      %v174 = vld [vmem:[%s158 + $0x90] sm:$0xff]
      %v175 = vld [vmem:[%s158 + $0xa0] sm:$0xff]
      %v176 = vld [vmem:[%s158 + $0xb0] sm:$0xff]
      %v177 = vld [vmem:[%s158 + $0xc0] sm:$0xff]
      %v178 = vld [vmem:[%s158 + $0xd0] sm:$0xff]
      %v179 = vld [vmem:[%s158 + $0xe0] sm:$0xff]
      %v180 = vld [vmem:[%s158 + $0xf0] sm:$0xff]
      %v181 = vpack.c.bf16 %v166, %v165
      %v182 = vpack.c.bf16 %v168, %v167
      %v183 = vpack.c.bf16 %v170, %v169
      %v184 = vpack.c.bf16 %v172, %v171
      %v185 = vpack.c.bf16 %v174, %v173
      %v186 = vpack.c.bf16 %v176, %v175
      %v187 = vpack.c.bf16 %v178, %v177
      %v188 = vpack.c.bf16 %v180, %v179
      %v189 = vld [vmem:[%s153] sm:$0xf]
      %190 = vmatprep.subr.bf16.mxu0 0
      %191 = vmatpush1.bf16.msra.mxu0 %v188
      %192 = vmatprep.subr.bf16.mxu0 0
      %193 = vmatpush1.bf16.msra.mxu0 %v187
      %194 = vmatprep.subr.bf16.mxu0 0
      %195 = vmatpush1.bf16.msra.mxu0 %v186
      %196 = vmatprep.subr.bf16.mxu0 0
      %197 = vmatpush1.bf16.msra.mxu0 %v185
      %198 = vmatprep.subr.bf16.mxu0 0
      %199 = vmatpush1.bf16.msra.mxu0 %v184
      %200 = vmatprep.subr.bf16.mxu0 0
      %201 = vmatpush1.bf16.msra.mxu0 %v183
      %202 = vmatprep.subr.bf16.mxu0 0
      %203 = vmatpush1.bf16.msra.mxu0 %v182
      %204 = vmatprep.subr.bf16.mxu0 0
      %205 = vmatpush1.bf16.msra.mxu0 %v181
      %206 = vmatprep.subr.bf16.mxu0 0
      %207 = vmatpush2.bf16.msra.mxu0 0
      %208 = vmatprep.subr.bf16.mxu0 0
      %209 = vmatpush2.bf16.msra.mxu0 0
      %210 = vmatprep.subr.bf16.mxu0 0
      %211 = vmatpush2.bf16.msra.mxu0 0
      %212 = vmatprep.subr.bf16.mxu0 0
      %213 = vmatpush2.bf16.msra.mxu0 0
      %214 = vmatprep.subr.bf16.mxu0 0
      %215 = vmatpush2.bf16.msra.mxu0 0
      %216 = vmatprep.subr.bf16.mxu0 0
      %217 = vmatpush2.bf16.msra.mxu0 0
      %218 = vmatprep.subr.bf16.mxu0 0
      %219 = vmatpush2.bf16.msra.mxu0 0
      %220 = vmatprep.subr.bf16.mxu0 0
      %221 = vmatpush2.bf16.msra.mxu0 0
      %222 = vmatprep.mubr.bf16.mxu0 0
      %223 = vmatmul.mubr.bf16.gmra.mxu0 %v189
      %v224 = vpop.f32.mrf.mxu0
      %v225 = vadd.f32 0.0, %v224
      %v226 = vpop.f32.mrf.mxu0
      %v227 = vpop.f32.mrf.mxu0
      %v228 = vpop.f32.mrf.mxu0
      %229 = vdwg.mxu0
      %vm230 = vcmask 523264
      %231 = vst.msk [vmem:[%s163] sm:$0xff] %vm230, %v225
      %v232 = vld [vmem:[%s158] sm:$0xff]
      %v233 = vld [vmem:[%s158 + $0x10] sm:$0xff]
      %v234 = vld [vmem:[%s158 + $0x20] sm:$0xff]
      %v235 = vld [vmem:[%s158 + $0x30] sm:$0xff]
      %v236 = vld [vmem:[%s158 + $0x40] sm:$0xff]
      %v237 = vld [vmem:[%s158 + $0x50] sm:$0xff]
      %v238 = vld [vmem:[%s158 + $0x60] sm:$0xff]
      %v239 = vld [vmem:[%s158 + $0x70] sm:$0xff]
      %v240 = vld [vmem:[%s158 + $0x80] sm:$0xff]
      %v241 = vld [vmem:[%s158 + $0x90] sm:$0xff]
      %v242 = vld [vmem:[%s158 + $0xa0] sm:$0xff]
      %v243 = vld [vmem:[%s158 + $0xb0] sm:$0xff]
      %v244 = vld [vmem:[%s158 + $0xc0] sm:$0xff]
      %v245 = vld [vmem:[%s158 + $0xd0] sm:$0xff]
      %v246 = vld [vmem:[%s158 + $0xe0] sm:$0xff]
      %v247 = vld [vmem:[%s158 + $0xf0] sm:$0xff]
      %v248 = vpack.c.bf16 %v233, %v232
      %v249 = vpack.c.bf16 %v235, %v234
      %v250 = vpack.c.bf16 %v237, %v236
      %v251 = vpack.c.bf16 %v239, %v238
      %v252 = vpack.c.bf16 %v241, %v240
      %v253 = vpack.c.bf16 %v243, %v242
      %v254 = vpack.c.bf16 %v245, %v244
      %v255 = vpack.c.bf16 %v247, %v246
      %s256 = scalar_lea.vmem %s153, 4
      %v257 = vld [vmem:[%s256] sm:$0xf]
      %266 = vrot.lane.b32.xlu0 %v248, 64
      %v267 = vpop.permute.xlu0 %266
      %268 = vrot.lane.b32.xlu0 %v249, 64
      %v269 = vpop.permute.xlu0 %268
      %270 = vrot.lane.b32.xlu0 %v250, 64
      %v271 = vpop.permute.xlu0 %270
      %272 = vrot.lane.b32.xlu0 %v251, 64
      %v273 = vpop.permute.xlu0 %272
      %274 = vrot.lane.b32.xlu0 %v252, 64
      %v275 = vpop.permute.xlu0 %274
      %276 = vrot.lane.b32.xlu0 %v253, 64
      %v277 = vpop.permute.xlu0 %276
      %278 = vrot.lane.b32.xlu0 %v254, 64
      %v279 = vpop.permute.xlu0 %278
      %280 = vrot.lane.b32.xlu0 %v255, 64
      %v281 = vpop.permute.xlu0 %280
      %290 = vmatprep.subr.bf16.mxu0 0
      %291 = vmatpush1.bf16.msra.mxu0 %v281
      %292 = vmatprep.subr.bf16.mxu0 0
      %293 = vmatpush1.bf16.msra.mxu0 %v279
      %294 = vmatprep.subr.bf16.mxu0 0
      %295 = vmatpush1.bf16.msra.mxu0 %v277
      %296 = vmatprep.subr.bf16.mxu0 0
      %297 = vmatpush1.bf16.msra.mxu0 %v275
      %298 = vmatprep.subr.bf16.mxu0 0
      %299 = vmatpush1.bf16.msra.mxu0 %v273
      %300 = vmatprep.subr.bf16.mxu0 0
      %301 = vmatpush1.bf16.msra.mxu0 %v271
      %302 = vmatprep.subr.bf16.mxu0 0
      %303 = vmatpush1.bf16.msra.mxu0 %v269
      %304 = vmatprep.subr.bf16.mxu0 0
      %305 = vmatpush1.bf16.msra.mxu0 %v267
      %306 = vmatprep.subr.bf16.mxu0 0
      %307 = vmatpush2.bf16.msra.mxu0 0
      %308 = vmatprep.subr.bf16.mxu0 0
      %309 = vmatpush2.bf16.msra.mxu0 0
      %310 = vmatprep.subr.bf16.mxu0 0
      %311 = vmatpush2.bf16.msra.mxu0 0
      %312 = vmatprep.subr.bf16.mxu0 0
      %313 = vmatpush2.bf16.msra.mxu0 0
      %314 = vmatprep.subr.bf16.mxu0 0
      %315 = vmatpush2.bf16.msra.mxu0 0
      %316 = vmatprep.subr.bf16.mxu0 0
      %317 = vmatpush2.bf16.msra.mxu0 0
      %318 = vmatprep.subr.bf16.mxu0 0
      %319 = vmatpush2.bf16.msra.mxu0 0
      %320 = vmatprep.subr.bf16.mxu0 0
      %321 = vmatpush2.bf16.msra.mxu0 0
      %322 = vmatprep.mubr.bf16.mxu0 0
      %323 = vmatmul.mubr.bf16.gmra.mxu0 %v257
      %v324 = vpop.f32.mrf.mxu0
      %v325 = vadd.f32 0.0, %v324
      %v326 = vpop.f32.mrf.mxu0
      %v327 = vpop.f32.mrf.mxu0
      %v328 = vpop.f32.mrf.mxu0
      %329 = vdwg.mxu0
      %s330 = scalar_lea.vmem %s163, 8
      %331 = vst.msk [vmem:[%s330] sm:$0xff] %vm230, %v325
      %v332 = vld [vmem:[%s158 + $0x8] sm:$0xff]
      %v333 = vld [vmem:[%s158 + $0x18] sm:$0xff]
      %v334 = vld [vmem:[%s158 + $0x28] sm:$0xff]
      %v335 = vld [vmem:[%s158 + $0x38] sm:$0xff]
      %v336 = vld [vmem:[%s158 + $0x48] sm:$0xff]
      %v337 = vld [vmem:[%s158 + $0x58] sm:$0xff]
      %v338 = vld [vmem:[%s158 + $0x68] sm:$0xff]
      %v339 = vld [vmem:[%s158 + $0x78] sm:$0xff]
      %v340 = vld [vmem:[%s158 + $0x88] sm:$0xff]
      %v341 = vld [vmem:[%s158 + $0x98] sm:$0xff]
      %v342 = vld [vmem:[%s158 + $0xa8] sm:$0xff]
      %v343 = vld [vmem:[%s158 + $0xb8] sm:$0xff]
      %v344 = vld [vmem:[%s158 + $0xc8] sm:$0xff]
      %v345 = vld [vmem:[%s158 + $0xd8] sm:$0xff]
      %v346 = vld [vmem:[%s158 + $0xe8] sm:$0xff]
      %v347 = vld [vmem:[%s158 + $0xf8] sm:$0xff]
      %v348 = vpack.c.bf16 %v333, %v332
      %v349 = vpack.c.bf16 %v335, %v334
      %v350 = vpack.c.bf16 %v337, %v336
      %v351 = vpack.c.bf16 %v339, %v338
      %v352 = vpack.c.bf16 %v341, %v340
      %v353 = vpack.c.bf16 %v343, %v342
      %v354 = vpack.c.bf16 %v345, %v344
      %v355 = vpack.c.bf16 %v347, %v346
      %s356 = scalar_lea.vmem %s153, 8
      %v357 = vld [vmem:[%s356] sm:$0xf]
      %358 = vmatprep.subr.bf16.mxu0 0
      %359 = vmatpush1.bf16.msra.mxu0 %v355
      %360 = vmatprep.subr.bf16.mxu0 0
      %361 = vmatpush1.bf16.msra.mxu0 %v354
      %362 = vmatprep.subr.bf16.mxu0 0
      %363 = vmatpush1.bf16.msra.mxu0 %v353
      %364 = vmatprep.subr.bf16.mxu0 0
      %365 = vmatpush1.bf16.msra.mxu0 %v352
      %366 = vmatprep.subr.bf16.mxu0 0
      %367 = vmatpush1.bf16.msra.mxu0 %v351
      %368 = vmatprep.subr.bf16.mxu0 0
      %369 = vmatpush1.bf16.msra.mxu0 %v350
      %370 = vmatprep.subr.bf16.mxu0 0
      %371 = vmatpush1.bf16.msra.mxu0 %v349
      %372 = vmatprep.subr.bf16.mxu0 0
      %373 = vmatpush1.bf16.msra.mxu0 %v348
      %374 = vmatprep.subr.bf16.mxu0 0
      %375 = vmatpush2.bf16.msra.mxu0 0
      %376 = vmatprep.subr.bf16.mxu0 0
      %377 = vmatpush2.bf16.msra.mxu0 0
      %378 = vmatprep.subr.bf16.mxu0 0
      %379 = vmatpush2.bf16.msra.mxu0 0
      %380 = vmatprep.subr.bf16.mxu0 0
      %381 = vmatpush2.bf16.msra.mxu0 0
      %382 = vmatprep.subr.bf16.mxu0 0
      %383 = vmatpush2.bf16.msra.mxu0 0
      %384 = vmatprep.subr.bf16.mxu0 0
      %385 = vmatpush2.bf16.msra.mxu0 0
      %386 = vmatprep.subr.bf16.mxu0 0
      %387 = vmatpush2.bf16.msra.mxu0 0
      %388 = vmatprep.subr.bf16.mxu0 0
      %389 = vmatpush2.bf16.msra.mxu0 0
      %390 = vmatprep.mubr.bf16.mxu0 0
      %391 = vmatmul.mubr.bf16.gmra.mxu0 %v357
      %v392 = vpop.f32.mrf.mxu0
      %v393 = vadd.f32 0.0, %v392
      %v394 = vpop.f32.mrf.mxu0
      %v395 = vpop.f32.mrf.mxu0
      %v396 = vpop.f32.mrf.mxu0
      %397 = vdwg.mxu0
      %s398 = scalar_lea.vmem %s163, 16
      %399 = vst.msk [vmem:[%s398] sm:$0xff] %vm230, %v393
      %v400 = vld [vmem:[%s158 + $0x8] sm:$0xff]
      %v401 = vld [vmem:[%s158 + $0x18] sm:$0xff]
      %v402 = vld [vmem:[%s158 + $0x28] sm:$0xff]
      %v403 = vld [vmem:[%s158 + $0x38] sm:$0xff]
      %v404 = vld [vmem:[%s158 + $0x48] sm:$0xff]
      %v405 = vld [vmem:[%s158 + $0x58] sm:$0xff]
      %v406 = vld [vmem:[%s158 + $0x68] sm:$0xff]
      %v407 = vld [vmem:[%s158 + $0x78] sm:$0xff]
      %v408 = vld [vmem:[%s158 + $0x88] sm:$0xff]
      %v409 = vld [vmem:[%s158 + $0x98] sm:$0xff]
      %v410 = vld [vmem:[%s158 + $0xa8] sm:$0xff]
      %v411 = vld [vmem:[%s158 + $0xb8] sm:$0xff]
      %v412 = vld [vmem:[%s158 + $0xc8] sm:$0xff]
      %v413 = vld [vmem:[%s158 + $0xd8] sm:$0xff]
      %v414 = vld [vmem:[%s158 + $0xe8] sm:$0xff]
      %v415 = vld [vmem:[%s158 + $0xf8] sm:$0xff]
      %v416 = vpack.c.bf16 %v401, %v400
      %v417 = vpack.c.bf16 %v403, %v402
      %v418 = vpack.c.bf16 %v405, %v404
      %v419 = vpack.c.bf16 %v407, %v406
      %v420 = vpack.c.bf16 %v409, %v408
      %v421 = vpack.c.bf16 %v411, %v410
      %v422 = vpack.c.bf16 %v413, %v412
      %v423 = vpack.c.bf16 %v415, %v414
      %s424 = scalar_lea.vmem %s153, 12
      %v425 = vld [vmem:[%s424] sm:$0xf]
      %434 = vrot.lane.b32.xlu0 %v416, 64
      %v435 = vpop.permute.xlu0 %434
      %436 = vrot.lane.b32.xlu0 %v417, 64
      %v437 = vpop.permute.xlu0 %436
      %438 = vrot.lane.b32.xlu0 %v418, 64
      %v439 = vpop.permute.xlu0 %438
      %440 = vrot.lane.b32.xlu0 %v419, 64
      %v441 = vpop.permute.xlu0 %440
      %442 = vrot.lane.b32.xlu0 %v420, 64
      %v443 = vpop.permute.xlu0 %442
      %444 = vrot.lane.b32.xlu0 %v421, 64
      %v445 = vpop.permute.xlu0 %444
      %446 = vrot.lane.b32.xlu0 %v422, 64
      %v447 = vpop.permute.xlu0 %446
      %448 = vrot.lane.b32.xlu0 %v423, 64
      %v449 = vpop.permute.xlu0 %448
      %458 = vmatprep.subr.bf16.mxu0 0
      %459 = vmatpush1.bf16.msra.mxu0 %v449
      %460 = vmatprep.subr.bf16.mxu0 0
      %461 = vmatpush1.bf16.msra.mxu0 %v447
      %462 = vmatprep.subr.bf16.mxu0 0
      %463 = vmatpush1.bf16.msra.mxu0 %v445
      %464 = vmatprep.subr.bf16.mxu0 0
      %465 = vmatpush1.bf16.msra.mxu0 %v443
      %466 = vmatprep.subr.bf16.mxu0 0
      %467 = vmatpush1.bf16.msra.mxu0 %v441
      %468 = vmatprep.subr.bf16.mxu0 0
      %469 = vmatpush1.bf16.msra.mxu0 %v439
      %470 = vmatprep.subr.bf16.mxu0 0
      %471 = vmatpush1.bf16.msra.mxu0 %v437
      %472 = vmatprep.subr.bf16.mxu0 0
      %473 = vmatpush1.bf16.msra.mxu0 %v435
      %474 = vmatprep.subr.bf16.mxu0 0
      %475 = vmatpush2.bf16.msra.mxu0 0
      %476 = vmatprep.subr.bf16.mxu0 0
      %477 = vmatpush2.bf16.msra.mxu0 0
      %478 = vmatprep.subr.bf16.mxu0 0
      %479 = vmatpush2.bf16.msra.mxu0 0
      %480 = vmatprep.subr.bf16.mxu0 0
      %481 = vmatpush2.bf16.msra.mxu0 0
      %482 = vmatprep.subr.bf16.mxu0 0
      %483 = vmatpush2.bf16.msra.mxu0 0
      %484 = vmatprep.subr.bf16.mxu0 0
      %485 = vmatpush2.bf16.msra.mxu0 0
      %486 = vmatprep.subr.bf16.mxu0 0
      %487 = vmatpush2.bf16.msra.mxu0 0
      %488 = vmatprep.subr.bf16.mxu0 0
      %489 = vmatpush2.bf16.msra.mxu0 0
      %490 = vmatprep.mubr.bf16.mxu0 0
      %491 = vmatmul.mubr.bf16.gmra.mxu0 %v425
      %v492 = vpop.f32.mrf.mxu0
      %v493 = vadd.f32 0.0, %v492
      %v494 = vpop.f32.mrf.mxu0
      %v495 = vpop.f32.mrf.mxu0
      %v496 = vpop.f32.mrf.mxu0
      %497 = vdwg.mxu0
      %s498 = scalar_lea.vmem %s163, 24
      %499 = vst.msk [vmem:[%s498] sm:$0xff] %vm230, %v493
      %p500 = scmp.lt.s32.totalorder %s13, 1
      %s501 = scalar_select %p500, %s13, 1
      %s502 = smul.addr %s501, 4
      %s503 = smul.addr %s502, 8
      %s504 = scalar_lea.vmem %s2, %s503
      // Predicated region
      $region29: #{simulated_clustered_attention_qk.2} parent=27 // pred_check
        %p505 = pneg %p83
      $region30: #{simulated_clustered_attention_qk.2} parent=27 // pred_check_branch
        %507 = sbr.rel (%p505) target = $region32
      $region31: #{simulated_clustered_attention_qk.2} parent=27 // pred_region
        _
      $region32: #{simulated_clustered_attention_qk.2} parent=27 // pred_fallthru
        _
    $region28: #{simulated_clustered_attention_qk.2} parent=5 // pred_fallthru
      _
    %p508 = scmp.le.s32.totalorder 2, %s8
    // Predicated region
    $region33: #{simulated_clustered_attention_qk.2} parent=5 // pred_check
      %p509 = pneg %p508
    $region34: #{simulated_clustered_attention_qk.2} parent=5 // pred_check_branch
      %511 = sbr.rel (%p509) target = $region36
    $region35: #{simulated_clustered_attention_qk.2} parent=5 // pred_region
      %s512 = ssub.s32 %s8, 2
      // Predicated region
      $region37: #{simulated_clustered_attention_qk.2} parent=35 // pred_check
        %p513 = pneg %p89
      $region38: #{simulated_clustered_attention_qk.2} parent=35 // pred_check_branch
        %515 = sbr.rel (%p513) target = $region40
      $region39: #{simulated_clustered_attention_qk.2} parent=35 // pred_region
        %p516 = scmp.lt.s32.totalorder %s14, 1
        %s517 = scalar_select %p516, %s14, 1
        %s518 = smul.addr %s517, 4
        %s519 = smul.addr %s518, 8
        %s520 = scalar_lea.vmem %s2, %s519
      $region40: #{simulated_clustered_attention_qk.2} parent=35 // pred_fallthru
        _
    $region36: #{simulated_clustered_attention_qk.2} parent=5 // pred_fallthru
      _
  $region6: #{simulated_clustered_attention_qk.2} parent=0 // loop_footer
    %s12 = sadd.s32 1, %s8
  $region7: #{simulated_clustered_attention_qk.2} parent=0 // loop_footer_branch
    %7 = sbr.rel target = $region3
  $region8: #{simulated_clustered_attention_qk.2} parent=0 // loop_exit
    _

</llo_original>
